<compile_context>
chip_gen: v7x
topology: tpu7x:2x2x1
jax: 0.10.0
libtpu: 0.0.40
codegen_flags: <defaults>
</compile_context>

<pallas_src>
import jax
import jax.numpy as jnp
from jax.experimental import pallas as pl
from jax.experimental.pallas import tpu as pltpu


def _round_up(x, m):
    return ((x + m - 1) // m) * m


def decoder_step_kernel(emb_ref, hid0_ref, enc_ref,
                        wa_h_ref, wa_e_ref, ba_ref, v_ref,
                        wih_e_ref, wih_w_ref, bih_ref, whh_ref, bhh_ref,
                        wfc_o_ref, wfc_w_ref, wfc_e_ref, bfc_ref,
                        pred_ref, hout_ref,
                        enc_proj_ref):
    t = pl.program_id(0)
    B, S, D2 = enc_ref.shape
    Hd = hid0_ref.shape[1]
    wdt = wa_h_ref.dtype          # matmul operand dtype (f32 default, bf16 on v6e/v7x)

    @pl.when(t == 0)
    def _init():
        # hidden carry lives in the resident output block
        hout_ref[...] = hid0_ref[...]
        # encoder projection is step-invariant: compute once, keep in VMEM scratch
        enc0 = enc_ref[...]
        enc_proj_ref[...] = jnp.dot(
            enc0.reshape(B * S, D2).astype(wdt), wa_e_ref[...],
            preferred_element_type=jnp.float32).reshape(B, S, Hd)

    emb = emb_ref[0]              # (B, E)  embedding for this step
    hid = hout_ref[...]           # (B, Hd) carried hidden state
    enc = enc_ref[...]            # (B, S, 2He)

    # ---------------- attention ----------------
    hid_proj = jnp.dot(hid.astype(wdt), wa_h_ref[...],
                       preferred_element_type=jnp.float32)                 # (B, Hd)
    energy = jnp.tanh(hid_proj[:, None, :] + enc_proj_ref[...] + ba_ref[...])  # (B, S, Hd)
    # VPU lane reduce instead of a degenerate (B*S,Hd)@(Hd,1) MXU matmul
    scores = jnp.sum(energy * v_ref[...], axis=-1)                         # (B, S)
    scores = scores - jnp.max(scores, axis=1, keepdims=True)
    e = jnp.exp(scores)
    a = e / jnp.sum(e, axis=1, keepdims=True)                              # softmax over S

    # ---------------- context ----------------
    if S >= 128:
        # large-S: ride the MXU with a batched contraction
        weighted = jax.lax.dot_general(
            a[:, None, :], enc, (((2,), (1,)), ((0,), (0,))),
            preferred_element_type=jnp.float32).reshape(B, D2)
    else:
        # small-S: VPU broadcast + reduce (avoids M=1 batched matmul relayouts)
        weighted = jnp.sum(a[:, :, None] * enc, axis=1)                    # (B, 2He)

    # ---------------- GRU single step (per-gate, lane-aligned) ----------------
    def gate(g):
        gi = (jnp.dot(emb.astype(wdt), wih_e_ref[g], preferred_element_type=jnp.float32)
              + jnp.dot(weighted.astype(wdt), wih_w_ref[g], preferred_element_type=jnp.float32)
              + bih_ref[g])
        gh = (jnp.dot(hid.astype(wdt), whh_ref[g], preferred_element_type=jnp.float32)
              + bhh_ref[g])
        return gi, gh

    gi_r, gh_r = gate(0)
    gi_z, gh_z = gate(1)
    gi_n, gh_n = gate(2)
    r = jax.nn.sigmoid(gi_r + gh_r)
    z = jax.nn.sigmoid(gi_z + gh_z)
    n = jnp.tanh(gi_n + r * gh_n)
    h_new = (1.0 - z) * n + z * hid                                        # (B, Hd)

    # ---------------- fc_out (O padded to lane-dense width) ----------------
    pred = (jnp.dot(h_new.astype(wdt), wfc_o_ref[...], preferred_element_type=jnp.float32)
            + jnp.dot(weighted.astype(wdt), wfc_w_ref[...], preferred_element_type=jnp.float32)
            + jnp.dot(emb.astype(wdt), wfc_e_ref[...], preferred_element_type=jnp.float32)
            + bfc_ref[...])                                                # (B, O_pad)

    pred_ref[0] = pred
    hout_ref[...] = h_new


def prepare_decoder_params(p, weight_dtype=jnp.float32):
    """One-time weight prep: transpose, split per input block / per gate, pad O to 128."""
    Hd = p["W_hh"].shape[1]
    E = p["embedding"].shape[1]
    O = p["W_fc"].shape[0]
    He2 = p["W_attn"].shape[1] - Hd
    O_pad = _round_up(max(O, 128), 128)
    wdt = weight_dtype

    wa_t = p["W_attn"].T.astype(wdt)                       # (Hd+2He, Hd), order [hidden, enc]
    wa_h, wa_e = wa_t[:Hd], wa_t[Hd:]
    ba = p["b_attn"].reshape(1, 1, Hd).astype(jnp.float32)
    v3 = p["v"].reshape(1, 1, Hd).astype(jnp.float32)

    wih_t = p["W_ih"].T.astype(wdt)                        # (E+2He, 3Hd), order [emb, weighted]
    wih_e_all, wih_w_all = wih_t[:E], wih_t[E:]
    wih_e3 = jnp.stack([wih_e_all[:, g * Hd:(g + 1) * Hd] for g in range(3)])   # (3, E, Hd)
    wih_w3 = jnp.stack([wih_w_all[:, g * Hd:(g + 1) * Hd] for g in range(3)])   # (3, 2He, Hd)
    bih3 = p["b_ih"].reshape(3, 1, Hd).astype(jnp.float32)
    whh_t = p["W_hh"].T.astype(wdt)                        # (Hd, 3Hd)
    whh3 = jnp.stack([whh_t[:, g * Hd:(g + 1) * Hd] for g in range(3)])         # (3, Hd, Hd)
    bhh3 = p["b_hh"].reshape(3, 1, Hd).astype(jnp.float32)

    wfc_t = jnp.pad(p["W_fc"].T, ((0, 0), (0, O_pad - O))).astype(wdt)  # (Hd+2He+E, O_pad)
    wfc_o, wfc_w, wfc_e = wfc_t[:Hd], wfc_t[Hd:Hd + He2], wfc_t[Hd + He2:]
    bfc = jnp.pad(p["b_fc"], (0, O_pad - O)).reshape(1, O_pad).astype(jnp.float32)

    return dict(embedding=p["embedding"].astype(jnp.float32), output_dim=O,
                wa_h=wa_h, wa_e=wa_e, ba=ba, v=v3,
                wih_e3=wih_e3, wih_w3=wih_w3, bih3=bih3, whh3=whh3, bhh3=bhh3,
                wfc_o=wfc_o, wfc_w=wfc_w, wfc_e=wfc_e, bfc=bfc)


def decoder_decode_steps(tokens_T, hidden0, encoder_outputs, kp):
    """Run T teacher-forced decoder steps in ONE pallas_call (grid over steps).

    tokens_T: (T, B) int32, hidden0: (B, Hd), encoder_outputs: (S, B, 2He) torch-style.
    Returns predictions (T, B, O) and final hidden (B, Hd).
    """
    T, B = tokens_T.shape
    S = encoder_outputs.shape[0]
    He2 = encoder_outputs.shape[2]
    Hd = hidden0.shape[1]
    O = kp["output_dim"]
    O_pad = kp["bfc"].shape[1]
    E = kp["embedding"].shape[1]
    Bp = _round_up(max(B, 8), 8)                           # pad batch to full sublanes

    # per-sequence glue (embedding gather for all steps, layout permute, batch pad)
    emb_T = kp["embedding"][tokens_T]                      # (T, B, E)   dropout = identity
    emb_T = jnp.pad(emb_T, ((0, 0), (0, Bp - B), (0, 0)))
    hid0 = jnp.pad(hidden0.astype(jnp.float32), ((0, Bp - B), (0, 0)))
    enc_bf = jnp.pad(jnp.transpose(encoder_outputs, (1, 0, 2)).astype(jnp.float32),
                     ((0, Bp - B), (0, 0), (0, 0)))        # (Bp, S, 2He)

    const2 = lambda t: (0, 0)
    const3 = lambda t: (0, 0, 0)
    grid_spec = pltpu.PrefetchScalarGridSpec(
        num_scalar_prefetch=0,
        grid=(T,),
        in_specs=[
            pl.BlockSpec((1, Bp, E), lambda t: (t, 0, 0)),   # per-step embedding
            pl.BlockSpec((Bp, Hd), const2),                  # initial hidden   (resident)
            pl.BlockSpec((Bp, S, He2), const3),              # encoder outputs  (resident)
            pl.BlockSpec((Hd, Hd), const2),                  # wa_h             (resident)
            pl.BlockSpec((He2, Hd), const2),                 # wa_e
            pl.BlockSpec((1, 1, Hd), const3),                # b_attn
            pl.BlockSpec((1, 1, Hd), const3),                # v
            pl.BlockSpec((3, E, Hd), const3),                # W_ih (emb part, per gate)
            pl.BlockSpec((3, He2, Hd), const3),              # W_ih (weighted part, per gate)
            pl.BlockSpec((3, 1, Hd), const3),                # b_ih per gate
            pl.BlockSpec((3, Hd, Hd), const3),               # W_hh per gate
            pl.BlockSpec((3, 1, Hd), const3),                # b_hh per gate
            pl.BlockSpec((Hd, O_pad), const2),               # W_fc (output part)
            pl.BlockSpec((He2, O_pad), const2),              # W_fc (weighted part)
            pl.BlockSpec((E, O_pad), const2),                # W_fc (embedded part)
            pl.BlockSpec((1, O_pad), const2),                # b_fc
        ],
        out_specs=(pl.BlockSpec((1, Bp, O_pad), lambda t: (t, 0, 0)),   # per-step prediction
                   pl.BlockSpec((Bp, Hd), const2)),                     # hidden carry / final
        scratch_shapes=[pltpu.VMEM((Bp, S, Hd), jnp.float32)],          # cached enc @ Wa_e
    )

    pred_T, h_fin = pl.pallas_call(
        decoder_step_kernel,
        out_shape=(jax.ShapeDtypeStruct((T, Bp, O_pad), jnp.float32),
                   jax.ShapeDtypeStruct((Bp, Hd), jnp.float32)),
        grid_spec=grid_spec,
        compiler_params=pltpu.CompilerParams(
            dimension_semantics=("arbitrary",)),   # sequential carry over decode steps
    )(emb_T, hid0, enc_bf,
      kp["wa_h"], kp["wa_e"], kp["ba"], kp["v"],
      kp["wih_e3"], kp["wih_w3"], kp["bih3"], kp["whh3"], kp["bhh3"],
      kp["wfc_o"], kp["wfc_w"], kp["wfc_e"], kp["bfc"])

    return pred_T[:, :B, :O], h_fin[:B]


def decoder_forward(inp_tokens, hidden, encoder_outputs, kp):
    """Single decoder step matching Decoder.forward: tokens (B,), hidden (B,Hd),
    encoder_outputs (S,B,2He) -> (prediction (B,O), hidden (B,Hd))."""
    pred_T, h_new = decoder_decode_steps(inp_tokens[None, :], hidden, encoder_outputs, kp)
    return pred_T[0], h_new


def decoder_reference(inp_tokens, hidden, encoder_outputs, p):
    """Pure-JAX reference mirroring the PyTorch forward (eval mode)."""
    emb = p["embedding"][inp_tokens]                       # (B, E)
    S = encoder_outputs.shape[0]
    Hd = hidden.shape[1]
    enc_bf = jnp.transpose(encoder_outputs, (1, 0, 2))     # (B, S, 2He)
    hid_rep = jnp.repeat(hidden[:, None, :], S, axis=1)    # (B, S, Hd)
    energy = jnp.tanh(jnp.concatenate([hid_rep, enc_bf], axis=2) @ p["W_attn"].T + p["b_attn"])
    attn = (energy @ p["v"].T)[..., 0]
    a = jax.nn.softmax(attn, axis=1)
    weighted = jnp.einsum("bs,bsd->bd", a, enc_bf)
    x = jnp.concatenate([emb, weighted], axis=1)
    gi = x @ p["W_ih"].T + p["b_ih"]
    gh = hidden @ p["W_hh"].T + p["b_hh"]
    r = jax.nn.sigmoid(gi[:, :Hd] + gh[:, :Hd])
    z = jax.nn.sigmoid(gi[:, Hd:2 * Hd] + gh[:, Hd:2 * Hd])
    n = jnp.tanh(gi[:, 2 * Hd:] + r * gh[:, 2 * Hd:])
    h_new = (1.0 - z) * n + z * hidden
    pred = jnp.concatenate([h_new, weighted, emb], axis=1) @ p["W_fc"].T + p["b_fc"]
    return pred, h_new


if __name__ == "__main__":
    # Small shapes consistent with the module
    B, S, T = 4, 8, 4
    OUTPUT_DIM, EMB_DIM, ENC_HID, DEC_HID = 32, 16, 16, 32
    HE2 = 2 * ENC_HID

    key = jax.random.PRNGKey(0)
    ks = jax.random.split(key, 13)
    scale = 0.1
    params = {
        "embedding": scale * jax.random.normal(ks[0], (OUTPUT_DIM, EMB_DIM), jnp.float32),
        # attention: Linear(2He + Hd -> Hd), input feature order [hidden(Hd), enc(2He)]
        "W_attn": scale * jax.random.normal(ks[1], (DEC_HID, DEC_HID + HE2), jnp.float32),
        "b_attn": scale * jax.random.normal(ks[2], (DEC_HID,), jnp.float32),
        "v": scale * jax.random.normal(ks[3], (1, DEC_HID), jnp.float32),      # Linear(Hd -> 1)
        # GRU(E + 2He -> Hd), gate order [r, z, n]
        "W_ih": scale * jax.random.normal(ks[4], (3 * DEC_HID, EMB_DIM + HE2), jnp.float32),
        "b_ih": scale * jax.random.normal(ks[5], (3 * DEC_HID,), jnp.float32),
        "W_hh": scale * jax.random.normal(ks[6], (3 * DEC_HID, DEC_HID), jnp.float32),
        "b_hh": scale * jax.random.normal(ks[7], (3 * DEC_HID,), jnp.float32),
        # fc_out: Linear(2He + Hd + E -> output_dim), input order [output(Hd), weighted(2He), emb(E)]
        "W_fc": scale * jax.random.normal(ks[8], (OUTPUT_DIM, DEC_HID + HE2 + EMB_DIM), jnp.float32),
        "b_fc": scale * jax.random.normal(ks[9], (OUTPUT_DIM,), jnp.float32),
    }

    inp_tokens = jax.random.randint(ks[10], (B,), 0, OUTPUT_DIM, dtype=jnp.int32)
    hidden = jax.random.normal(ks[11], (B, DEC_HID), jnp.float32)
    encoder_outputs = jax.random.normal(jax.random.PRNGKey(42), (S, B, HE2), jnp.float32)
    tokens_T = jax.random.randint(ks[12], (T, B), 0, OUTPUT_DIM, dtype=jnp.int32)

    # one-time kernel-ready weight prep (outside the decode path)
    kp = prepare_decoder_params(params)

    # ---- single step (exactly Decoder.forward) ----
    pred, h_new = decoder_forward(inp_tokens, hidden, encoder_outputs, kp)
    jax.block_until_ready((pred, h_new))
    pred_ref, h_ref = decoder_reference(inp_tokens, hidden, encoder_outputs, params)
    assert pred.shape == (B, OUTPUT_DIM) and h_new.shape == (B, DEC_HID)
    assert jnp.allclose(pred, pred_ref, rtol=1e-2, atol=1e-2)
    assert jnp.allclose(h_new, h_ref, rtol=1e-2, atol=1e-2)

    # ---- T teacher-forced steps in a single pallas_call (weights stay resident) ----
    pred_T, h_T = decoder_decode_steps(tokens_T, hidden, encoder_outputs, kp)
    jax.block_until_ready((pred_T, h_T))
    preds_ref = []
    h = hidden
    for t in range(T):
        pr, h = decoder_reference(tokens_T[t], h, encoder_outputs, params)
        preds_ref.append(pr)
    preds_ref = jnp.stack(preds_ref)
    assert pred_T.shape == (T, B, OUTPUT_DIM) and h_T.shape == (B, DEC_HID)
    assert jnp.allclose(pred_T, preds_ref, rtol=1e-2, atol=1e-2)
    assert jnp.allclose(h_T, h, rtol=1e-2, atol=1e-2)

    # ---- bf16 weights (f32 accumulate / f32 elementwise) — v6e/v7x-friendly path ----
    kp_bf16 = prepare_decoder_params(params, weight_dtype=jnp.bfloat16)
    pred_bf, h_bf = decoder_decode_steps(tokens_T, hidden, encoder_outputs, kp_bf16)
    jax.block_until_ready((pred_bf, h_bf))
    assert jnp.allclose(pred_bf, preds_ref, rtol=5e-2, atol=5e-2)
    assert jnp.allclose(h_bf, h, rtol=5e-2, atol=5e-2)

    print("KERNEL_OK")
</pallas_src>

<mosaic_0001>
module attributes {stable_mosaic.version = 11 : i64} {
  func.func @decoder_step_kernel(%arg0: i32, %arg1: memref<1x8x16xf32, #tpu.memory_space<vmem>>, %arg2: memref<8x32xf32, #tpu.memory_space<vmem>>, %arg3: memref<8x8x32xf32, #tpu.memory_space<vmem>>, %arg4: memref<32x32xf32, #tpu.memory_space<vmem>>, %arg5: memref<32x32xf32, #tpu.memory_space<vmem>>, %arg6: memref<1x1x32xf32, #tpu.memory_space<vmem>>, %arg7: memref<1x1x32xf32, #tpu.memory_space<vmem>>, %arg8: memref<3x16x32xf32, #tpu.memory_space<vmem>>, %arg9: memref<3x32x32xf32, #tpu.memory_space<vmem>>, %arg10: memref<3x1x32xf32, #tpu.memory_space<vmem>>, %arg11: memref<3x32x32xf32, #tpu.memory_space<vmem>>, %arg12: memref<3x1x32xf32, #tpu.memory_space<vmem>>, %arg13: memref<32x128xf32, #tpu.memory_space<vmem>>, %arg14: memref<32x128xf32, #tpu.memory_space<vmem>>, %arg15: memref<16x128xf32, #tpu.memory_space<vmem>>, %arg16: memref<1x128xf32, #tpu.memory_space<vmem>>, %arg17: memref<1x8x128xf32, #tpu.memory_space<vmem>>, %arg18: memref<8x32xf32, #tpu.memory_space<vmem>>, %arg19: memref<8x8x32xf32, #tpu.memory_space<vmem>>) attributes {dimension_semantics = [#tpu.dimension_semantics<arbitrary>], iteration_bounds = array<i64: 1>, scalar_prefetch = 0 : i64, scratch_operands = 1 : i64, tpu.core_type = #tpu.core_type<tc>, window_params = [{transform_indices = @transform_0, window_bounds = array<i64: 1, 8, 16>}, {pipeline_mode = #tpu.pipeline_mode<synchronous>, transform_indices = @transform_1, window_bounds = array<i64: 8, 32>}, {pipeline_mode = #tpu.pipeline_mode<synchronous>, transform_indices = @transform_2, window_bounds = array<i64: 8, 8, 32>}, {pipeline_mode = #tpu.pipeline_mode<synchronous>, transform_indices = @transform_3, window_bounds = array<i64: 32, 32>}, {pipeline_mode = #tpu.pipeline_mode<synchronous>, transform_indices = @transform_4, window_bounds = array<i64: 32, 32>}, {pipeline_mode = #tpu.pipeline_mode<synchronous>, transform_indices = @transform_5, window_bounds = array<i64: 1, 1, 32>}, {pipeline_mode = #tpu.pipeline_mode<synchronous>, transform_indices = @transform_6, window_bounds = array<i64: 1, 1, 32>}, {pipeline_mode = #tpu.pipeline_mode<synchronous>, transform_indices = @transform_7, window_bounds = array<i64: 3, 16, 32>}, {pipeline_mode = #tpu.pipeline_mode<synchronous>, transform_indices = @transform_8, window_bounds = array<i64: 3, 32, 32>}, {pipeline_mode = #tpu.pipeline_mode<synchronous>, transform_indices = @transform_9, window_bounds = array<i64: 3, 1, 32>}, {pipeline_mode = #tpu.pipeline_mode<synchronous>, transform_indices = @transform_10, window_bounds = array<i64: 3, 32, 32>}, {pipeline_mode = #tpu.pipeline_mode<synchronous>, transform_indices = @transform_11, window_bounds = array<i64: 3, 1, 32>}, {pipeline_mode = #tpu.pipeline_mode<synchronous>, transform_indices = @transform_12, window_bounds = array<i64: 32, 128>}, {pipeline_mode = #tpu.pipeline_mode<synchronous>, transform_indices = @transform_13, window_bounds = array<i64: 32, 128>}, {pipeline_mode = #tpu.pipeline_mode<synchronous>, transform_indices = @transform_14, window_bounds = array<i64: 16, 128>}, {pipeline_mode = #tpu.pipeline_mode<synchronous>, transform_indices = @transform_15, window_bounds = array<i64: 1, 128>}, {transform_indices = @transform_16, window_bounds = array<i64: 1, 8, 128>}, {pipeline_mode = #tpu.pipeline_mode<synchronous>, transform_indices = @transform_17, window_bounds = array<i64: 8, 32>}]} {
    %c0_i32 = arith.constant 0 : i32
    %0 = arith.cmpi eq, %arg0, %c0_i32 : i32
    %1 = arith.extui %0 : i1 to i32
    %c0_i32_0 = arith.constant 0 : i32
    %2 = arith.cmpi ne, %1, %c0_i32_0 : i32
    scf.if %2 {
      %c0_94 = arith.constant 0 : index
      %c0_95 = arith.constant 0 : index
      %123 = vector.load %arg2[%c0_94, %c0_95] : memref<8x32xf32, #tpu.memory_space<vmem>>, vector<8x32xf32>
      %c0_96 = arith.constant 0 : index
      %c0_97 = arith.constant 0 : index
      %124 = vector.load %arg18[%c0_96, %c0_97] : memref<8x32xf32, #tpu.memory_space<vmem>>, vector<8x32xf32>
      tpu.vector_store %arg18[%c0_96, %c0_97], %123 {strides = array<i32>} : memref<8x32xf32, #tpu.memory_space<vmem>>, vector<8x32xf32>,
      %c0_98 = arith.constant 0 : index
      %c0_99 = arith.constant 0 : index
      %c0_100 = arith.constant 0 : index
      %125 = vector.load %arg3[%c0_98, %c0_99, %c0_100] : memref<8x8x32xf32, #tpu.memory_space<vmem>>, vector<8x8x32xf32>
      %126 = vector.shape_cast %125 : vector<8x8x32xf32> to vector<64x32xf32>
      %c0_101 = arith.constant 0 : index
      %c0_102 = arith.constant 0 : index
      %127 = vector.load %arg5[%c0_101, %c0_102] : memref<32x32xf32, #tpu.memory_space<vmem>>, vector<32x32xf32>
      %cst_103 = arith.constant dense<0.000000e+00> : vector<64x32xf32>
      %128 = tpu.matmul %126, %127, %cst_103 {dimension_numbers = #tpu.dot_dimension_numbers<[1], [0], [0], [1], [0, 0, 1, 1], [], []>} : vector<64x32xf32>, vector<32x32xf32>, vector<64x32xf32> -> vector<64x32xf32>
      %129 = vector.shape_cast %128 : vector<64x32xf32> to vector<8x8x32xf32>
      %c0_104 = arith.constant 0 : index
      %c0_105 = arith.constant 0 : index
      %c0_106 = arith.constant 0 : index
      %130 = vector.load %arg19[%c0_104, %c0_105, %c0_106] : memref<8x8x32xf32, #tpu.memory_space<vmem>>, vector<8x8x32xf32>
      tpu.vector_store %arg19[%c0_104, %c0_105, %c0_106], %129 {strides = array<i32>} : memref<8x8x32xf32, #tpu.memory_space<vmem>>, vector<8x8x32xf32>,
    } else {
    }
    %c0 = arith.constant 0 : index
    %c0_1 = arith.constant 0 : index
    %c0_2 = arith.constant 0 : index
    %3 = vector.load %arg1[%c0, %c0_1, %c0_2] : memref<1x8x16xf32, #tpu.memory_space<vmem>>, vector<1x8x16xf32>
    %4 = vector.shape_cast %3 : vector<1x8x16xf32> to vector<8x16xf32>
    %c0_3 = arith.constant 0 : index
    %c0_4 = arith.constant 0 : index
    %5 = vector.load %arg18[%c0_3, %c0_4] : memref<8x32xf32, #tpu.memory_space<vmem>>, vector<8x32xf32>
    %c0_5 = arith.constant 0 : index
    %c0_6 = arith.constant 0 : index
    %c0_7 = arith.constant 0 : index
    %6 = vector.load %arg3[%c0_5, %c0_6, %c0_7] : memref<8x8x32xf32, #tpu.memory_space<vmem>>, vector<8x8x32xf32>
    %c0_8 = arith.constant 0 : index
    %c0_9 = arith.constant 0 : index
    %7 = vector.load %arg4[%c0_8, %c0_9] : memref<32x32xf32, #tpu.memory_space<vmem>>, vector<32x32xf32>
    %cst = arith.constant dense<0.000000e+00> : vector<8x32xf32>
    %8 = tpu.matmul %5, %7, %cst {dimension_numbers = #tpu.dot_dimension_numbers<[1], [0], [0], [1], [0, 0, 1, 1], [], []>} : vector<8x32xf32>, vector<32x32xf32>, vector<8x32xf32> -> vector<8x32xf32>
    %9 = vector.shape_cast %8 : vector<8x32xf32> to vector<8x1x32xf32>
    %c0_10 = arith.constant 0 : index
    %c0_11 = arith.constant 0 : index
    %c0_12 = arith.constant 0 : index
    %10 = vector.load %arg19[%c0_10, %c0_11, %c0_12] : memref<8x8x32xf32, #tpu.memory_space<vmem>>, vector<8x8x32xf32>
    %11 = vector.broadcast %9 : vector<8x1x32xf32> to vector<8x8x32xf32>
    %12 = arith.addf %11, %10 : vector<8x8x32xf32>
    %c0_13 = arith.constant 0 : index
    %c0_14 = arith.constant 0 : index
    %c0_15 = arith.constant 0 : index
    %13 = vector.load %arg6[%c0_13, %c0_14, %c0_15] : memref<1x1x32xf32, #tpu.memory_space<vmem>>, vector<1x1x32xf32>
    %14 = vector.broadcast %13 : vector<1x1x32xf32> to vector<8x8x32xf32>
    %15 = arith.addf %12, %14 : vector<8x8x32xf32>
    %16 = math.tanh %15 : vector<8x8x32xf32>
    %c0_16 = arith.constant 0 : index
    %c0_17 = arith.constant 0 : index
    %c0_18 = arith.constant 0 : index
    %17 = vector.load %arg7[%c0_16, %c0_17, %c0_18] : memref<1x1x32xf32, #tpu.memory_space<vmem>>, vector<1x1x32xf32>
    %18 = vector.broadcast %17 : vector<1x1x32xf32> to vector<8x8x32xf32>
    %19 = arith.mulf %16, %18 : vector<8x8x32xf32>
    %cst_19 = arith.constant dense<0.000000e+00> : vector<8x8xf32>
    %20 = vector.multi_reduction <add>, %19, %cst_19 [2] : vector<8x8x32xf32> to vector<8x8xf32>
    %cst_20 = arith.constant dense<0xFF800000> : vector<8xf32>
    %21 = vector.multi_reduction <maximumf>, %20, %cst_20 [1] : vector<8x8xf32> to vector<8xf32>
    %22 = vector.shape_cast %21 : vector<8xf32> to vector<8x1xf32>
    %23 = vector.broadcast %22 : vector<8x1xf32> to vector<8x8xf32>
    %24 = arith.subf %20, %23 : vector<8x8xf32>
    %25 = math.exp %24 : vector<8x8xf32>
    %cst_21 = arith.constant dense<0.000000e+00> : vector<8xf32>
    %26 = vector.multi_reduction <add>, %25, %cst_21 [1] : vector<8x8xf32> to vector<8xf32>
    %27 = vector.shape_cast %26 : vector<8xf32> to vector<8x1xf32>
    %28 = vector.broadcast %27 : vector<8x1xf32> to vector<8x8xf32>
    %29 = arith.divf %25, %28 : vector<8x8xf32>
    %30 = vector.shape_cast %29 : vector<8x8xf32> to vector<8x8x1xf32>
    %31 = vector.broadcast %30 : vector<8x8x1xf32> to vector<8x8x32xf32>
    %32 = arith.mulf %31, %6 : vector<8x8x32xf32>
    %cst_22 = arith.constant dense<0.000000e+00> : vector<8x32xf32>
    %33 = vector.multi_reduction <add>, %32, %cst_22 [1] : vector<8x8x32xf32> to vector<8x32xf32>
    %c0_23 = arith.constant 0 : index
    %c0_24 = arith.constant 0 : index
    %c0_25 = arith.constant 0 : index
    %34 = vector.load %arg8[%c0_23, %c0_24, %c0_25] : memref<3x16x32xf32, #tpu.memory_space<vmem>>, vector<1x16x32xf32>
    %35 = vector.shape_cast %34 : vector<1x16x32xf32> to vector<16x32xf32>
    %cst_26 = arith.constant dense<0.000000e+00> : vector<8x32xf32>
    %36 = tpu.matmul %4, %35, %cst_26 {dimension_numbers = #tpu.dot_dimension_numbers<[1], [0], [0], [1], [0, 0, 1, 1], [], []>} : vector<8x16xf32>, vector<16x32xf32>, vector<8x32xf32> -> vector<8x32xf32>
    %c0_27 = arith.constant 0 : index
    %c0_28 = arith.constant 0 : index
    %c0_29 = arith.constant 0 : index
    %37 = vector.load %arg9[%c0_27, %c0_28, %c0_29] : memref<3x32x32xf32, #tpu.memory_space<vmem>>, vector<1x32x32xf32>
    %38 = vector.shape_cast %37 : vector<1x32x32xf32> to vector<32x32xf32>
    %cst_30 = arith.constant dense<0.000000e+00> : vector<8x32xf32>
    %39 = tpu.matmul %33, %38, %cst_30 {dimension_numbers = #tpu.dot_dimension_numbers<[1], [0], [0], [1], [0, 0, 1, 1], [], []>} : vector<8x32xf32>, vector<32x32xf32>, vector<8x32xf32> -> vector<8x32xf32>
    %40 = arith.addf %36, %39 : vector<8x32xf32>
    %c0_31 = arith.constant 0 : index
    %c0_32 = arith.constant 0 : index
    %c0_33 = arith.constant 0 : index
    %41 = vector.load %arg10[%c0_31, %c0_32, %c0_33] : memref<3x1x32xf32, #tpu.memory_space<vmem>>, vector<1x1x32xf32>
    %42 = vector.shape_cast %41 : vector<1x1x32xf32> to vector<1x32xf32>
    %43 = vector.broadcast %42 : vector<1x32xf32> to vector<8x32xf32>
    %44 = arith.addf %40, %43 : vector<8x32xf32>
    %c0_34 = arith.constant 0 : index
    %c0_35 = arith.constant 0 : index
    %c0_36 = arith.constant 0 : index
    %45 = vector.load %arg11[%c0_34, %c0_35, %c0_36] : memref<3x32x32xf32, #tpu.memory_space<vmem>>, vector<1x32x32xf32>
    %46 = vector.shape_cast %45 : vector<1x32x32xf32> to vector<32x32xf32>
    %cst_37 = arith.constant dense<0.000000e+00> : vector<8x32xf32>
    %47 = tpu.matmul %5, %46, %cst_37 {dimension_numbers = #tpu.dot_dimension_numbers<[1], [0], [0], [1], [0, 0, 1, 1], [], []>} : vector<8x32xf32>, vector<32x32xf32>, vector<8x32xf32> -> vector<8x32xf32>
    %c0_38 = arith.constant 0 : index
    %c0_39 = arith.constant 0 : index
    %c0_40 = arith.constant 0 : index
    %48 = vector.load %arg12[%c0_38, %c0_39, %c0_40] : memref<3x1x32xf32, #tpu.memory_space<vmem>>, vector<1x1x32xf32>
    %49 = vector.shape_cast %48 : vector<1x1x32xf32> to vector<1x32xf32>
    %50 = vector.broadcast %49 : vector<1x32xf32> to vector<8x32xf32>
    %51 = arith.addf %47, %50 : vector<8x32xf32>
    %c1 = arith.constant 1 : index
    %c0_41 = arith.constant 0 : index
    %c0_42 = arith.constant 0 : index
    %52 = vector.load %arg8[%c1, %c0_41, %c0_42] : memref<3x16x32xf32, #tpu.memory_space<vmem>>, vector<1x16x32xf32>
    %53 = vector.shape_cast %52 : vector<1x16x32xf32> to vector<16x32xf32>
    %cst_43 = arith.constant dense<0.000000e+00> : vector<8x32xf32>
    %54 = tpu.matmul %4, %53, %cst_43 {dimension_numbers = #tpu.dot_dimension_numbers<[1], [0], [0], [1], [0, 0, 1, 1], [], []>} : vector<8x16xf32>, vector<16x32xf32>, vector<8x32xf32> -> vector<8x32xf32>
    %c1_44 = arith.constant 1 : index
    %c0_45 = arith.constant 0 : index
    %c0_46 = arith.constant 0 : index
    %55 = vector.load %arg9[%c1_44, %c0_45, %c0_46] : memref<3x32x32xf32, #tpu.memory_space<vmem>>, vector<1x32x32xf32>
    %56 = vector.shape_cast %55 : vector<1x32x32xf32> to vector<32x32xf32>
    %cst_47 = arith.constant dense<0.000000e+00> : vector<8x32xf32>
    %57 = tpu.matmul %33, %56, %cst_47 {dimension_numbers = #tpu.dot_dimension_numbers<[1], [0], [0], [1], [0, 0, 1, 1], [], []>} : vector<8x32xf32>, vector<32x32xf32>, vector<8x32xf32> -> vector<8x32xf32>
    %58 = arith.addf %54, %57 : vector<8x32xf32>
    %c1_48 = arith.constant 1 : index
    %c0_49 = arith.constant 0 : index
    %c0_50 = arith.constant 0 : index
    %59 = vector.load %arg10[%c1_48, %c0_49, %c0_50] : memref<3x1x32xf32, #tpu.memory_space<vmem>>, vector<1x1x32xf32>
    %60 = vector.shape_cast %59 : vector<1x1x32xf32> to vector<1x32xf32>
    %61 = vector.broadcast %60 : vector<1x32xf32> to vector<8x32xf32>
    %62 = arith.addf %58, %61 : vector<8x32xf32>
    %c1_51 = arith.constant 1 : index
    %c0_52 = arith.constant 0 : index
    %c0_53 = arith.constant 0 : index
    %63 = vector.load %arg11[%c1_51, %c0_52, %c0_53] : memref<3x32x32xf32, #tpu.memory_space<vmem>>, vector<1x32x32xf32>
    %64 = vector.shape_cast %63 : vector<1x32x32xf32> to vector<32x32xf32>
    %cst_54 = arith.constant dense<0.000000e+00> : vector<8x32xf32>
    %65 = tpu.matmul %5, %64, %cst_54 {dimension_numbers = #tpu.dot_dimension_numbers<[1], [0], [0], [1], [0, 0, 1, 1], [], []>} : vector<8x32xf32>, vector<32x32xf32>, vector<8x32xf32> -> vector<8x32xf32>
    %c1_55 = arith.constant 1 : index
    %c0_56 = arith.constant 0 : index
    %c0_57 = arith.constant 0 : index
    %66 = vector.load %arg12[%c1_55, %c0_56, %c0_57] : memref<3x1x32xf32, #tpu.memory_space<vmem>>, vector<1x1x32xf32>
    %67 = vector.shape_cast %66 : vector<1x1x32xf32> to vector<1x32xf32>
    %68 = vector.broadcast %67 : vector<1x32xf32> to vector<8x32xf32>
    %69 = arith.addf %65, %68 : vector<8x32xf32>
    %c2 = arith.constant 2 : index
    %c0_58 = arith.constant 0 : index
    %c0_59 = arith.constant 0 : index
    %70 = vector.load %arg8[%c2, %c0_58, %c0_59] : memref<3x16x32xf32, #tpu.memory_space<vmem>>, vector<1x16x32xf32>
    %71 = vector.shape_cast %70 : vector<1x16x32xf32> to vector<16x32xf32>
    %cst_60 = arith.constant dense<0.000000e+00> : vector<8x32xf32>
    %72 = tpu.matmul %4, %71, %cst_60 {dimension_numbers = #tpu.dot_dimension_numbers<[1], [0], [0], [1], [0, 0, 1, 1], [], []>} : vector<8x16xf32>, vector<16x32xf32>, vector<8x32xf32> -> vector<8x32xf32>
    %c2_61 = arith.constant 2 : index
    %c0_62 = arith.constant 0 : index
    %c0_63 = arith.constant 0 : index
    %73 = vector.load %arg9[%c2_61, %c0_62, %c0_63] : memref<3x32x32xf32, #tpu.memory_space<vmem>>, vector<1x32x32xf32>
    %74 = vector.shape_cast %73 : vector<1x32x32xf32> to vector<32x32xf32>
    %cst_64 = arith.constant dense<0.000000e+00> : vector<8x32xf32>
    %75 = tpu.matmul %33, %74, %cst_64 {dimension_numbers = #tpu.dot_dimension_numbers<[1], [0], [0], [1], [0, 0, 1, 1], [], []>} : vector<8x32xf32>, vector<32x32xf32>, vector<8x32xf32> -> vector<8x32xf32>
    %76 = arith.addf %72, %75 : vector<8x32xf32>
    %c2_65 = arith.constant 2 : index
    %c0_66 = arith.constant 0 : index
    %c0_67 = arith.constant 0 : index
    %77 = vector.load %arg10[%c2_65, %c0_66, %c0_67] : memref<3x1x32xf32, #tpu.memory_space<vmem>>, vector<1x1x32xf32>
    %78 = vector.shape_cast %77 : vector<1x1x32xf32> to vector<1x32xf32>
    %79 = vector.broadcast %78 : vector<1x32xf32> to vector<8x32xf32>
    %80 = arith.addf %76, %79 : vector<8x32xf32>
    %c2_68 = arith.constant 2 : index
    %c0_69 = arith.constant 0 : index
    %c0_70 = arith.constant 0 : index
    %81 = vector.load %arg11[%c2_68, %c0_69, %c0_70] : memref<3x32x32xf32, #tpu.memory_space<vmem>>, vector<1x32x32xf32>
    %82 = vector.shape_cast %81 : vector<1x32x32xf32> to vector<32x32xf32>
    %cst_71 = arith.constant dense<0.000000e+00> : vector<8x32xf32>
    %83 = tpu.matmul %5, %82, %cst_71 {dimension_numbers = #tpu.dot_dimension_numbers<[1], [0], [0], [1], [0, 0, 1, 1], [], []>} : vector<8x32xf32>, vector<32x32xf32>, vector<8x32xf32> -> vector<8x32xf32>
    %c2_72 = arith.constant 2 : index
    %c0_73 = arith.constant 0 : index
    %c0_74 = arith.constant 0 : index
    %84 = vector.load %arg12[%c2_72, %c0_73, %c0_74] : memref<3x1x32xf32, #tpu.memory_space<vmem>>, vector<1x1x32xf32>
    %85 = vector.shape_cast %84 : vector<1x1x32xf32> to vector<1x32xf32>
    %86 = vector.broadcast %85 : vector<1x32xf32> to vector<8x32xf32>
    %87 = arith.addf %83, %86 : vector<8x32xf32>
    %88 = arith.addf %44, %51 : vector<8x32xf32>
    %89 = arith.negf %88 : vector<8x32xf32>
    %90 = math.exp %89 : vector<8x32xf32>
    %cst_75 = arith.constant 1.000000e+00 : f32
    %91 = vector.broadcast %cst_75 : f32 to vector<8x32xf32>
    %92 = arith.addf %91, %90 : vector<8x32xf32>
    %93 = arith.divf %91, %92 : vector<8x32xf32>
    %94 = arith.addf %62, %69 : vector<8x32xf32>
    %95 = arith.negf %94 : vector<8x32xf32>
    %96 = math.exp %95 : vector<8x32xf32>
    %cst_76 = arith.constant 1.000000e+00 : f32
    %97 = vector.broadcast %cst_76 : f32 to vector<8x32xf32>
    %98 = arith.addf %97, %96 : vector<8x32xf32>
    %99 = arith.divf %97, %98 : vector<8x32xf32>
    %100 = arith.mulf %93, %87 : vector<8x32xf32>
    %101 = arith.addf %80, %100 : vector<8x32xf32>
    %102 = math.tanh %101 : vector<8x32xf32>
    %cst_77 = arith.constant 1.000000e+00 : f32
    %103 = vector.broadcast %cst_77 : f32 to vector<8x32xf32>
    %104 = arith.subf %103, %99 : vector<8x32xf32>
    %105 = arith.mulf %104, %102 : vector<8x32xf32>
    %106 = arith.mulf %99, %5 : vector<8x32xf32>
    %107 = arith.addf %105, %106 : vector<8x32xf32>
    %c0_78 = arith.constant 0 : index
    %c0_79 = arith.constant 0 : index
    %108 = vector.load %arg13[%c0_78, %c0_79] : memref<32x128xf32, #tpu.memory_space<vmem>>, vector<32x128xf32>
    %cst_80 = arith.constant dense<0.000000e+00> : vector<8x128xf32>
    %109 = tpu.matmul %107, %108, %cst_80 {dimension_numbers = #tpu.dot_dimension_numbers<[1], [0], [0], [1], [0, 0, 1, 1], [], []>} : vector<8x32xf32>, vector<32x128xf32>, vector<8x128xf32> -> vector<8x128xf32>
    %c0_81 = arith.constant 0 : index
    %c0_82 = arith.constant 0 : index
    %110 = vector.load %arg14[%c0_81, %c0_82] : memref<32x128xf32, #tpu.memory_space<vmem>>, vector<32x128xf32>
    %cst_83 = arith.constant dense<0.000000e+00> : vector<8x128xf32>
    %111 = tpu.matmul %33, %110, %cst_83 {dimension_numbers = #tpu.dot_dimension_numbers<[1], [0], [0], [1], [0, 0, 1, 1], [], []>} : vector<8x32xf32>, vector<32x128xf32>, vector<8x128xf32> -> vector<8x128xf32>
    %112 = arith.addf %109, %111 : vector<8x128xf32>
    %c0_84 = arith.constant 0 : index
    %c0_85 = arith.constant 0 : index
    %113 = vector.load %arg15[%c0_84, %c0_85] : memref<16x128xf32, #tpu.memory_space<vmem>>, vector<16x128xf32>
    %cst_86 = arith.constant dense<0.000000e+00> : vector<8x128xf32>
    %114 = tpu.matmul %4, %113, %cst_86 {dimension_numbers = #tpu.dot_dimension_numbers<[1], [0], [0], [1], [0, 0, 1, 1], [], []>} : vector<8x16xf32>, vector<16x128xf32>, vector<8x128xf32> -> vector<8x128xf32>
    %115 = arith.addf %112, %114 : vector<8x128xf32>
    %c0_87 = arith.constant 0 : index
    %c0_88 = arith.constant 0 : index
    %116 = vector.load %arg16[%c0_87, %c0_88] : memref<1x128xf32, #tpu.memory_space<vmem>>, vector<1x128xf32>
    %117 = vector.broadcast %116 : vector<1x128xf32> to vector<8x128xf32>
    %118 = arith.addf %115, %117 : vector<8x128xf32>
    %c0_89 = arith.constant 0 : index
    %c0_90 = arith.constant 0 : index
    %c0_91 = arith.constant 0 : index
    %119 = vector.load %arg17[%c0_89, %c0_90, %c0_91] : memref<1x8x128xf32, #tpu.memory_space<vmem>>, vector<1x8x128xf32>
    %120 = vector.shape_cast %119 : vector<1x8x128xf32> to vector<8x128xf32>
    %121 = vector.shape_cast %118 : vector<8x128xf32> to vector<1x8x128xf32>
    tpu.vector_store %arg17[%c0_89, %c0_90, %c0_91], %121 {strides = array<i32>} : memref<1x8x128xf32, #tpu.memory_space<vmem>>, vector<1x8x128xf32>,
    %c0_92 = arith.constant 0 : index
    %c0_93 = arith.constant 0 : index
    %122 = vector.load %arg18[%c0_92, %c0_93] : memref<8x32xf32, #tpu.memory_space<vmem>>, vector<8x32xf32>
    tpu.vector_store %arg18[%c0_92, %c0_93], %107 {strides = array<i32>} : memref<8x32xf32, #tpu.memory_space<vmem>>, vector<8x32xf32>,
    return
  }
  func.func @transform_0(%arg0: i32) -> (i32, i32, i32) {
    %c0_i32 = arith.constant 0 : i32
    %c0_i32_0 = arith.constant 0 : i32
    %c0_i32_1 = arith.constant 0 : i32
    return %arg0, %c0_i32, %c0_i32_0 : i32, i32, i32
  }
  func.func @transform_1(%arg0: i32) -> (i32, i32) {
    %c0_i32 = arith.constant 0 : i32
    %c0_i32_0 = arith.constant 0 : i32
    %c0_i32_1 = arith.constant 0 : i32
    return %c0_i32, %c0_i32_0 : i32, i32
  }
  func.func @transform_2(%arg0: i32) -> (i32, i32, i32) {
    %c0_i32 = arith.constant 0 : i32
    %c0_i32_0 = arith.constant 0 : i32
    %c0_i32_1 = arith.constant 0 : i32
    %c0_i32_2 = arith.constant 0 : i32
    return %c0_i32, %c0_i32_0, %c0_i32_1 : i32, i32, i32
  }
  func.func @transform_3(%arg0: i32) -> (i32, i32) {
    %c0_i32 = arith.constant 0 : i32
    %c0_i32_0 = arith.constant 0 : i32
    %c0_i32_1 = arith.constant 0 : i32
    return %c0_i32, %c0_i32_0 : i32, i32
  }
  func.func @transform_4(%arg0: i32) -> (i32, i32) {
    %c0_i32 = arith.constant 0 : i32
    %c0_i32_0 = arith.constant 0 : i32
    %c0_i32_1 = arith.constant 0 : i32
    return %c0_i32, %c0_i32_0 : i32, i32
  }
  func.func @transform_5(%arg0: i32) -> (i32, i32, i32) {
    %c0_i32 = arith.constant 0 : i32
    %c0_i32_0 = arith.constant 0 : i32
    %c0_i32_1 = arith.constant 0 : i32
    %c0_i32_2 = arith.constant 0 : i32
    return %c0_i32, %c0_i32_0, %c0_i32_1 : i32, i32, i32
  }
  func.func @transform_6(%arg0: i32) -> (i32, i32, i32) {
    %c0_i32 = arith.constant 0 : i32
    %c0_i32_0 = arith.constant 0 : i32
    %c0_i32_1 = arith.constant 0 : i32
    %c0_i32_2 = arith.constant 0 : i32
    return %c0_i32, %c0_i32_0, %c0_i32_1 : i32, i32, i32
  }
  func.func @transform_7(%arg0: i32) -> (i32, i32, i32) {
    %c0_i32 = arith.constant 0 : i32
    %c0_i32_0 = arith.constant 0 : i32
    %c0_i32_1 = arith.constant 0 : i32
    %c0_i32_2 = arith.constant 0 : i32
    return %c0_i32, %c0_i32_0, %c0_i32_1 : i32, i32, i32
  }
  func.func @transform_8(%arg0: i32) -> (i32, i32, i32) {
    %c0_i32 = arith.constant 0 : i32
    %c0_i32_0 = arith.constant 0 : i32
    %c0_i32_1 = arith.constant 0 : i32
    %c0_i32_2 = arith.constant 0 : i32
    return %c0_i32, %c0_i32_0, %c0_i32_1 : i32, i32, i32
  }
  func.func @transform_9(%arg0: i32) -> (i32, i32, i32) {
    %c0_i32 = arith.constant 0 : i32
    %c0_i32_0 = arith.constant 0 : i32
    %c0_i32_1 = arith.constant 0 : i32
    %c0_i32_2 = arith.constant 0 : i32
    return %c0_i32, %c0_i32_0, %c0_i32_1 : i32, i32, i32
  }
  func.func @transform_10(%arg0: i32) -> (i32, i32, i32) {
    %c0_i32 = arith.constant 0 : i32
    %c0_i32_0 = arith.constant 0 : i32
    %c0_i32_1 = arith.constant 0 : i32
    %c0_i32_2 = arith.constant 0 : i32
    return %c0_i32, %c0_i32_0, %c0_i32_1 : i32, i32, i32
  }
  func.func @transform_11(%arg0: i32) -> (i32, i32, i32) {
    %c0_i32 = arith.constant 0 : i32
    %c0_i32_0 = arith.constant 0 : i32
    %c0_i32_1 = arith.constant 0 : i32
    %c0_i32_2 = arith.constant 0 : i32
    return %c0_i32, %c0_i32_0, %c0_i32_1 : i32, i32, i32
  }
  func.func @transform_12(%arg0: i32) -> (i32, i32) {
    %c0_i32 = arith.constant 0 : i32
    %c0_i32_0 = arith.constant 0 : i32
    %c0_i32_1 = arith.constant 0 : i32
    return %c0_i32, %c0_i32_0 : i32, i32
  }
  func.func @transform_13(%arg0: i32) -> (i32, i32) {
    %c0_i32 = arith.constant 0 : i32
    %c0_i32_0 = arith.constant 0 : i32
    %c0_i32_1 = arith.constant 0 : i32
    return %c0_i32, %c0_i32_0 : i32, i32
  }
  func.func @transform_14(%arg0: i32) -> (i32, i32) {
    %c0_i32 = arith.constant 0 : i32
    %c0_i32_0 = arith.constant 0 : i32
    %c0_i32_1 = arith.constant 0 : i32
    return %c0_i32, %c0_i32_0 : i32, i32
  }
  func.func @transform_15(%arg0: i32) -> (i32, i32) {
    %c0_i32 = arith.constant 0 : i32
    %c0_i32_0 = arith.constant 0 : i32
    %c0_i32_1 = arith.constant 0 : i32
    return %c0_i32, %c0_i32_0 : i32, i32
  }
  func.func @transform_16(%arg0: i32) -> (i32, i32, i32) {
    %c0_i32 = arith.constant 0 : i32
    %c0_i32_0 = arith.constant 0 : i32
    %c0_i32_1 = arith.constant 0 : i32
    return %arg0, %c0_i32, %c0_i32_0 : i32, i32, i32
  }
  func.func @transform_17(%arg0: i32) -> (i32, i32) {
    %c0_i32 = arith.constant 0 : i32
    %c0_i32_0 = arith.constant 0 : i32
    %c0_i32_1 = arith.constant 0 : i32
    return %c0_i32, %c0_i32_0 : i32, i32
  }
}

</mosaic_0001>

<llo_original>
// kernel: tpu_custom_call.1
$region0: #{tpu_custom_call.1}
  #allocation0 [shape = 'u32[]', space=smem, size = 0x4, offset = 0x4, fixed_abs, tag = 'smem constant byte address 0x4 - core index']
  #allocation1 [shape = 'u32[144,128]{1,0:T(1,128)}', space=vmem, size = 0x12000, scoped, tag = 'internal scratch']
  #allocation2 [shape = 'f32[8,8,32]{2,1,0:T(8,128)}', space=vmem, size = 0x8000, scoped, tag = 'scratch operand']
  %s0 = inlined_call_operand.hbm [shape: f32[1,8,16], index: 0, kind: input, shape index: {}]
  %s1 = inlined_call_operand.hbm [shape: f32[8,32], index: 1, kind: input, shape index: {}]
  %s2 = inlined_call_operand.hbm [shape: f32[8,8,32], index: 2, kind: input, shape index: {}]
  %s3 = inlined_call_operand.hbm [shape: f32[32,32], index: 3, kind: input, shape index: {}]
  %s4 = inlined_call_operand.hbm [shape: f32[32,32], index: 4, kind: input, shape index: {}]
  %s5 = inlined_call_operand.vmem [shape: f32[1,1,32], index: 5, kind: input, shape index: {}]
  %s6 = inlined_call_operand.hbm [shape: f32[1,1,32], index: 6, kind: input, shape index: {}]
  %s7 = inlined_call_operand.hbm [shape: f32[3,16,32], index: 7, kind: input, shape index: {}]
  %s8 = inlined_call_operand.hbm [shape: f32[3,32,32], index: 8, kind: input, shape index: {}]
  %s9 = inlined_call_operand.hbm [shape: f32[3,1,32], index: 9, kind: input, shape index: {}]
  %s10 = inlined_call_operand.hbm [shape: f32[3,32,32], index: 10, kind: input, shape index: {}]
  %s11 = inlined_call_operand.hbm [shape: f32[3,1,32], index: 11, kind: input, shape index: {}]
  %s12 = inlined_call_operand.vmem [shape: f32[32,128], index: 12, kind: input, shape index: {}]
  %s13 = inlined_call_operand.hbm [shape: f32[32,128], index: 13, kind: input, shape index: {}]
  %s14 = inlined_call_operand.vmem [shape: f32[16,128], index: 14, kind: input, shape index: {}]
  %s15 = inlined_call_operand.vmem [shape: f32[1,128], index: 15, kind: input, shape index: {}]
  %s16 = inlined_call_operand.hbm [shape: f32[1,8,128], index: 16, kind: output, shape index: {0}]
  %s17 = inlined_call_operand.hbm [shape: f32[8,32], index: 17, kind: output, shape index: {1}]
  %18 = xla_tuple %s16, %s17
  %s19 = sld [smem:[#allocation0]]
  $region134: #{tpu_custom_call.1} parent=0
    _
  %s21 = ssub.s32 1, %s19
  %s22 = scalar_select 0, %s21, %s19
  $region1: #{tpu_custom_call.1} parent=0
    #allocation3 [shape = 'u8[4096]{0}', space=vmem, size = 0x1000, scoped, tag = 'input window, operand 0, single buffered']
    #allocation4 [shape = 's32[1]{0}', space=sflag, size = 0x4, scoped, tag = 'scoped memory for tpu_custom_call.1']
    #allocation5 [shape = 's32[1]{0}', space=sflag, size = 0x4, scoped, tag = 'scoped memory for tpu_custom_call.1']
    #allocation6 [shape = 'u8[4096]{0}', space=vmem, size = 0x1000, scoped, tag = 'input window, operand 1, single buffered']
    #allocation7 [shape = 's32[1]{0}', space=sflag, size = 0x4, scoped, tag = 'scoped memory for tpu_custom_call.1']
    #allocation8 [shape = 'u8[32768]{0}', space=vmem, size = 0x8000, scoped, tag = 'input window, operand 2, single buffered']
    #allocation9 [shape = 'u8[16384]{0}', space=vmem, size = 0x4000, scoped, tag = 'input window, operand 3, single buffered']
    #allocation10 [shape = 's32[1]{0}', space=sflag, size = 0x4, scoped, tag = 'scoped memory for tpu_custom_call.1']
    #allocation11 [shape = 'u8[16384]{0}', space=vmem, size = 0x4000, scoped, tag = 'input window, operand 4, single buffered']
    #allocation12 [shape = 'u8[512]{0}', space=vmem, size = 0x400, scoped, tag = 'input window, operand 6, single buffered']
    #allocation13 [shape = 's32[1]{0}', space=sflag, size = 0x4, scoped, tag = 'scoped memory for tpu_custom_call.1']
    #allocation14 [shape = 'u8[24576]{0}', space=vmem, size = 0x6000, scoped, tag = 'input window, operand 7, single buffered']
    #allocation15 [shape = 'u8[49152]{0}', space=vmem, size = 0xc000, scoped, tag = 'input window, operand 8, single buffered']
    #allocation16 [shape = 's32[1]{0}', space=sflag, size = 0x4, scoped, tag = 'scoped memory for tpu_custom_call.1']
    #allocation17 [shape = 'u8[1536]{0}', space=vmem, size = 0x800, scoped, tag = 'input window, operand 9, single buffered']
    #allocation18 [shape = 'u8[49152]{0}', space=vmem, size = 0xc000, scoped, tag = 'input window, operand 10, single buffered']
    #allocation19 [shape = 's32[1]{0}', space=sflag, size = 0x4, scoped, tag = 'scoped memory for tpu_custom_call.1']
    #allocation20 [shape = 'u8[1536]{0}', space=vmem, size = 0x800, scoped, tag = 'input window, operand 11, single buffered']
    #allocation21 [shape = 'u8[16384]{0}', space=vmem, size = 0x4000, scoped, tag = 'input window, operand 13, single buffered']
    #allocation22 [shape = 's32[1]{0}', space=sflag, size = 0x4, scoped, tag = 'scoped memory for tpu_custom_call.1']
    #allocation23 [shape = 'u8[4096]{0}', space=vmem, size = 0x1000, scoped, tag = 'output window, operand 0, single buffered']
    #allocation24 [shape = 'u8[4096]{0}', space=vmem, size = 0x1000, scoped, tag = 'output window, operand 1, single buffered']
    #allocation25 [shape = 's32[1]{0}', space=sflag, size = 0x4, scoped, tag = 'scoped memory for tpu_custom_call.1']
    %23 = vsyncpa [#allocation4], 0
    %24 = vsyncpa [#allocation7], 0
    %25 = vsyncpa [#allocation10], 0
    %26 = vsyncpa [#allocation13], 0
    %27 = vsyncpa [#allocation16], 0
    %28 = vsyncpa [#allocation19], 0
    %29 = vsyncpa [#allocation22], 0
    %30 = vsyncpa [#allocation5], 0
    %31 = vsyncpa [#allocation25], 0
    // Predicated region
    $region2: #{tpu_custom_call.1} parent=1 // pred_check
      _
    $region3: #{tpu_custom_call.1} parent=1 // pred_check_branch
      %33 = sbr.rel (0) target = $region5
    $region4: #{tpu_custom_call.1} parent=1 // pred_region
      %s35 = ssub.s32 128, 128
      %36 = vsyncadd [#allocation4], %s35
      %s38 = sshll.u32 [#allocation3], 4
      %s39 = int_to_ptr.vmem [resolvable:$true] %s38
      %41 = dma.hbm_to_vmem [thread:$0]  %s0, 128, %s39, [#allocation4]
    $region5: #{tpu_custom_call.1} parent=1 // pred_fallthru
      _
    // Predicated region
    $region6: #{tpu_custom_call.1} parent=1 // pred_check
      _
    $region7: #{tpu_custom_call.1} parent=1 // pred_check_branch
      %43 = sbr.rel (0) target = $region9
    $region8: #{tpu_custom_call.1} parent=1 // pred_region
      %s45 = ssub.s32 128, 128
      %46 = vsyncadd [#allocation7], %s45
      %s48 = sshll.u32 [#allocation6], 4
      %s49 = int_to_ptr.vmem [resolvable:$true] %s48
      %51 = dma.hbm_to_vmem [thread:$0]  %s1, 128, %s49, [#allocation7]
    $region9: #{tpu_custom_call.1} parent=1 // pred_fallthru
      _
    // Predicated region
    $region10: #{tpu_custom_call.1} parent=1 // pred_check
      _
    $region11: #{tpu_custom_call.1} parent=1 // pred_check_branch
      %53 = sbr.rel (0) target = $region13
    $region12: #{tpu_custom_call.1} parent=1 // pred_region
      %s55 = ssub.s32 1024, 1024
      %56 = vsyncadd [#allocation7], %s55
      %s57 = sshll.u32 [#allocation8], 4
      %s58 = int_to_ptr.vmem [resolvable:$true] %s57
      %63 = dma.hbm_to_vmem [thread:$0]  %s2, 1024, %s58, [#allocation7], 128, 128, 8
    $region13: #{tpu_custom_call.1} parent=1 // pred_fallthru
      _
    // Predicated region
    $region14: #{tpu_custom_call.1} parent=1 // pred_check
      _
    $region15: #{tpu_custom_call.1} parent=1 // pred_check_branch
      %65 = sbr.rel (0) target = $region17
    $region16: #{tpu_custom_call.1} parent=1 // pred_region
      %s67 = ssub.s32 512, 512
      %68 = vsyncadd [#allocation10], %s67
      %s69 = sshll.u32 [#allocation9], 4
      %s70 = int_to_ptr.vmem [resolvable:$true] %s69
      %75 = dma.hbm_to_vmem [thread:$0]  %s3, 512, %s70, [#allocation10], 128, 128, 8
    $region17: #{tpu_custom_call.1} parent=1 // pred_fallthru
      _
    // Predicated region
    $region18: #{tpu_custom_call.1} parent=1 // pred_check
      _
    $region19: #{tpu_custom_call.1} parent=1 // pred_check_branch
      %77 = sbr.rel (0) target = $region21
    $region20: #{tpu_custom_call.1} parent=1 // pred_region
      %s79 = ssub.s32 512, 512
      %80 = vsyncadd [#allocation10], %s79
      %s81 = sshll.u32 [#allocation11], 4
      %s82 = int_to_ptr.vmem [resolvable:$true] %s81
      %87 = dma.hbm_to_vmem [thread:$0]  %s4, 512, %s82, [#allocation10], 128, 128, 8
    $region21: #{tpu_custom_call.1} parent=1 // pred_fallthru
      _
    // Predicated region
    $region22: #{tpu_custom_call.1} parent=1 // pred_check
      _
    $region23: #{tpu_custom_call.1} parent=1 // pred_check_branch
      %89 = sbr.rel (0) target = $region25
    $region24: #{tpu_custom_call.1} parent=1 // pred_region
      _
    $region25: #{tpu_custom_call.1} parent=1 // pred_fallthru
      _
    // Predicated region
    $region26: #{tpu_custom_call.1} parent=1 // pred_check
      _
    $region27: #{tpu_custom_call.1} parent=1 // pred_check_branch
      %91 = sbr.rel (0) target = $region29
    $region28: #{tpu_custom_call.1} parent=1 // pred_region
      %s93 = ssub.s32 16, 16
      %94 = vsyncadd [#allocation13], %s93
      %s96 = sshll.u32 [#allocation12], 4
      %s97 = int_to_ptr.vmem [resolvable:$true] %s96
      %99 = dma.hbm_to_vmem [thread:$0]  %s6, 16, %s97, [#allocation13]
    $region29: #{tpu_custom_call.1} parent=1 // pred_fallthru
      _
    // Predicated region
    $region30: #{tpu_custom_call.1} parent=1 // pred_check
      _
    $region31: #{tpu_custom_call.1} parent=1 // pred_check_branch
      %101 = sbr.rel (0) target = $region33
    $region32: #{tpu_custom_call.1} parent=1 // pred_region
      %s103 = ssub.s32 768, 768
      %104 = vsyncadd [#allocation13], %s103
      %s105 = sshll.u32 [#allocation14], 4
      %s106 = int_to_ptr.vmem [resolvable:$true] %s105
      %111 = dma.hbm_to_vmem [thread:$0]  %s7, 768, %s106, [#allocation13], 128, 128, 8
    $region33: #{tpu_custom_call.1} parent=1 // pred_fallthru
      _
    // Predicated region
    $region34: #{tpu_custom_call.1} parent=1 // pred_check
      _
    $region35: #{tpu_custom_call.1} parent=1 // pred_check_branch
      %113 = sbr.rel (0) target = $region37
    $region36: #{tpu_custom_call.1} parent=1 // pred_region
      %s115 = ssub.s32 1536, 1536
      %116 = vsyncadd [#allocation16], %s115
      %s117 = sshll.u32 [#allocation15], 4
      %s118 = int_to_ptr.vmem [resolvable:$true] %s117
      %123 = dma.hbm_to_vmem [thread:$0]  %s8, 1536, %s118, [#allocation16], 128, 128, 8
    $region37: #{tpu_custom_call.1} parent=1 // pred_fallthru
      _
    // Predicated region
    $region38: #{tpu_custom_call.1} parent=1 // pred_check
      _
    $region39: #{tpu_custom_call.1} parent=1 // pred_check_branch
      %125 = sbr.rel (0) target = $region41
    $region40: #{tpu_custom_call.1} parent=1 // pred_region
      %s127 = ssub.s32 48, 48
      %128 = vsyncadd [#allocation16], %s127
      %s129 = sshll.u32 [#allocation17], 4
      %s130 = int_to_ptr.vmem [resolvable:$true] %s129
      %135 = dma.hbm_to_vmem [thread:$0]  %s9, 48, %s130, [#allocation16], 16, 16, 1
    $region41: #{tpu_custom_call.1} parent=1 // pred_fallthru
      _
    // Predicated region
    $region42: #{tpu_custom_call.1} parent=1 // pred_check
      _
    $region43: #{tpu_custom_call.1} parent=1 // pred_check_branch
      %137 = sbr.rel (0) target = $region45
    $region44: #{tpu_custom_call.1} parent=1 // pred_region
      %s139 = ssub.s32 1536, 1536
      %140 = vsyncadd [#allocation19], %s139
      %s141 = sshll.u32 [#allocation18], 4
      %s142 = int_to_ptr.vmem [resolvable:$true] %s141
      %147 = dma.hbm_to_vmem [thread:$0]  %s10, 1536, %s142, [#allocation19], 128, 128, 8
    $region45: #{tpu_custom_call.1} parent=1 // pred_fallthru
      _
    // Predicated region
    $region46: #{tpu_custom_call.1} parent=1 // pred_check
      _
    $region47: #{tpu_custom_call.1} parent=1 // pred_check_branch
      %149 = sbr.rel (0) target = $region49
    $region48: #{tpu_custom_call.1} parent=1 // pred_region
      %s151 = ssub.s32 48, 48
      %152 = vsyncadd [#allocation19], %s151
      %s153 = sshll.u32 [#allocation20], 4
      %s154 = int_to_ptr.vmem [resolvable:$true] %s153
      %159 = dma.hbm_to_vmem [thread:$0]  %s11, 48, %s154, [#allocation19], 16, 16, 1
    $region49: #{tpu_custom_call.1} parent=1 // pred_fallthru
      _
    // Predicated region
    $region50: #{tpu_custom_call.1} parent=1 // pred_check
      _
    $region51: #{tpu_custom_call.1} parent=1 // pred_check_branch
      %161 = sbr.rel (0) target = $region53
    $region52: #{tpu_custom_call.1} parent=1 // pred_region
      _
    $region53: #{tpu_custom_call.1} parent=1 // pred_fallthru
      _
    // Predicated region
    $region54: #{tpu_custom_call.1} parent=1 // pred_check
      _
    $region55: #{tpu_custom_call.1} parent=1 // pred_check_branch
      %163 = sbr.rel (0) target = $region57
    $region56: #{tpu_custom_call.1} parent=1 // pred_region
      %s165 = ssub.s32 512, 512
      %166 = vsyncadd [#allocation22], %s165
      %s167 = sshll.u32 [#allocation21], 4
      %s168 = int_to_ptr.vmem [resolvable:$true] %s167
      %173 = dma.hbm_to_vmem [thread:$0]  %s13, 512, %s168, [#allocation22], 128, 128, 8
    $region57: #{tpu_custom_call.1} parent=1 // pred_fallthru
      _
    // Predicated region
    $region58: #{tpu_custom_call.1} parent=1 // pred_check
      _
    $region59: #{tpu_custom_call.1} parent=1 // pred_check_branch
      %175 = sbr.rel (0) target = $region61
    $region60: #{tpu_custom_call.1} parent=1 // pred_region
      _
    $region61: #{tpu_custom_call.1} parent=1 // pred_fallthru
      _
    // Predicated region
    $region62: #{tpu_custom_call.1} parent=1 // pred_check
      _
    $region63: #{tpu_custom_call.1} parent=1 // pred_check_branch
      %177 = sbr.rel (0) target = $region65
    $region64: #{tpu_custom_call.1} parent=1 // pred_region
      _
    $region65: #{tpu_custom_call.1} parent=1 // pred_fallthru
      _
    // Predicated region
    $region66: #{tpu_custom_call.1} parent=1 // pred_check
      _
    $region67: #{tpu_custom_call.1} parent=1 // pred_check_branch
      %179 = sbr.rel (0) target = $region69
    $region68: #{tpu_custom_call.1} parent=1 // pred_region
      %180 = dma.done [#allocation4], 128
    $region69: #{tpu_custom_call.1} parent=1 // pred_fallthru
      _
    // Predicated region
    $region70: #{tpu_custom_call.1} parent=1 // pred_check
      _
    $region71: #{tpu_custom_call.1} parent=1 // pred_check_branch
      %182 = sbr.rel (0) target = $region73
    $region72: #{tpu_custom_call.1} parent=1 // pred_region
      %183 = dma.done [#allocation7], 128
    $region73: #{tpu_custom_call.1} parent=1 // pred_fallthru
      _
    // Predicated region
    $region74: #{tpu_custom_call.1} parent=1 // pred_check
      _
    $region75: #{tpu_custom_call.1} parent=1 // pred_check_branch
      %185 = sbr.rel (0) target = $region77
    $region76: #{tpu_custom_call.1} parent=1 // pred_region
      %186 = dma.done [#allocation7], 1024
    $region77: #{tpu_custom_call.1} parent=1 // pred_fallthru
      _
    // Predicated region
    $region78: #{tpu_custom_call.1} parent=1 // pred_check
      _
    $region79: #{tpu_custom_call.1} parent=1 // pred_check_branch
      %188 = sbr.rel (0) target = $region81
    $region80: #{tpu_custom_call.1} parent=1 // pred_region
      %189 = dma.done [#allocation10], 512
    $region81: #{tpu_custom_call.1} parent=1 // pred_fallthru
      _
    // Predicated region
    $region82: #{tpu_custom_call.1} parent=1 // pred_check
      _
    $region83: #{tpu_custom_call.1} parent=1 // pred_check_branch
      %191 = sbr.rel (0) target = $region85
    $region84: #{tpu_custom_call.1} parent=1 // pred_region
      %192 = dma.done [#allocation10], 512
    $region85: #{tpu_custom_call.1} parent=1 // pred_fallthru
      _
    // Predicated region
    $region86: #{tpu_custom_call.1} parent=1 // pred_check
      _
    $region87: #{tpu_custom_call.1} parent=1 // pred_check_branch
      %194 = sbr.rel (0) target = $region89
    $region88: #{tpu_custom_call.1} parent=1 // pred_region
      %195 = dma.done [#allocation13], 16
    $region89: #{tpu_custom_call.1} parent=1 // pred_fallthru
      _
    // Predicated region
    $region90: #{tpu_custom_call.1} parent=1 // pred_check
      _
    $region91: #{tpu_custom_call.1} parent=1 // pred_check_branch
      %197 = sbr.rel (0) target = $region93
    $region92: #{tpu_custom_call.1} parent=1 // pred_region
      %198 = dma.done [#allocation13], 768
    $region93: #{tpu_custom_call.1} parent=1 // pred_fallthru
      _
    // Predicated region
    $region94: #{tpu_custom_call.1} parent=1 // pred_check
      _
    $region95: #{tpu_custom_call.1} parent=1 // pred_check_branch
      %200 = sbr.rel (0) target = $region97
    $region96: #{tpu_custom_call.1} parent=1 // pred_region
      %201 = dma.done [#allocation16], 1536
    $region97: #{tpu_custom_call.1} parent=1 // pred_fallthru
      _
    // Predicated region
    $region98: #{tpu_custom_call.1} parent=1 // pred_check
      _
    $region99: #{tpu_custom_call.1} parent=1 // pred_check_branch
      %203 = sbr.rel (0) target = $region101
    $region100: #{tpu_custom_call.1} parent=1 // pred_region
      %204 = dma.done [#allocation16], 48
    $region101: #{tpu_custom_call.1} parent=1 // pred_fallthru
      _
    // Predicated region
    $region102: #{tpu_custom_call.1} parent=1 // pred_check
      _
    $region103: #{tpu_custom_call.1} parent=1 // pred_check_branch
      %206 = sbr.rel (0) target = $region105
    $region104: #{tpu_custom_call.1} parent=1 // pred_region
      %207 = dma.done [#allocation19], 1536
    $region105: #{tpu_custom_call.1} parent=1 // pred_fallthru
      _
    // Predicated region
    $region106: #{tpu_custom_call.1} parent=1 // pred_check
      _
    $region107: #{tpu_custom_call.1} parent=1 // pred_check_branch
      %209 = sbr.rel (0) target = $region109
    $region108: #{tpu_custom_call.1} parent=1 // pred_region
      %210 = dma.done [#allocation19], 48
    $region109: #{tpu_custom_call.1} parent=1 // pred_fallthru
      _
    // Predicated region
    $region110: #{tpu_custom_call.1} parent=1 // pred_check
      _
    $region111: #{tpu_custom_call.1} parent=1 // pred_check_branch
      %212 = sbr.rel (0) target = $region113
    $region112: #{tpu_custom_call.1} parent=1 // pred_region
      %213 = dma.done [#allocation22], 512
    $region113: #{tpu_custom_call.1} parent=1 // pred_fallthru
      _
    %p214 = scmp.eq.s32.totalorder 0, 0
    // Predicated region
    $region114: #{tpu_custom_call.1} parent=1 // pred_check
      %p215 = pneg %p214
    $region115: #{tpu_custom_call.1} parent=1 // pred_check_branch
      %217 = sbr.rel (%p215) target = $region117
    $region116: #{tpu_custom_call.1} parent=1 // pred_region
      %v218 = vld [vmem:[#allocation6] sm:$0xff]
      %vm219 = vcmask 261120
      %220 = vst.msk [vmem:[#allocation24] sm:$0xff] %vm219, %v218
      %v221 = vld [vmem:[#allocation8] sm:$0xff]
      %v222 = vld [vmem:[#allocation8 + $0x8] sm:$0xff]
      %v223 = vld [vmem:[#allocation8 + $0x10] sm:$0xff]
      %v224 = vld [vmem:[#allocation8 + $0x18] sm:$0xff]
      %v225 = vld [vmem:[#allocation8 + $0x20] sm:$0xff]
      %v226 = vld [vmem:[#allocation8 + $0x28] sm:$0xff]
      %v227 = vld [vmem:[#allocation8 + $0x30] sm:$0xff]
      %v228 = vld [vmem:[#allocation8 + $0x38] sm:$0xff]
      %v229 = vld [vmem:[#allocation11] sm:$0xff]
      %v230 = vld [vmem:[#allocation11 + $0x8] sm:$0xff]
      %v231 = vld [vmem:[#allocation11 + $0x10] sm:$0xff]
      %v232 = vld [vmem:[#allocation11 + $0x18] sm:$0xff]
      %v234 = vsel %vm219, %v221, 0
      %v237 = vsel %vm219, %v222, 0
      %v240 = vsel %vm219, %v223, 0
      %v243 = vsel %vm219, %v224, 0
      %v246 = vsel %vm219, %v225, 0
      %v249 = vsel %vm219, %v226, 0
      %v252 = vsel %vm219, %v227, 0
      %v255 = vsel %vm219, %v228, 0
      %257 = vmatprep.subr.mxu0 0.0
      %258 = vmatpush1.msra.mxu0 %v229
      %259 = vmatprep.subr.mxu0 0.0
      %260 = vmatpush1.msra.mxu0 %v230
      %261 = vmatprep.subr.mxu0 0.0
      %262 = vmatpush1.msra.mxu0 %v231
      %263 = vmatprep.subr.mxu0 0.0
      %264 = vmatpush1.msra.mxu0 %v232
      %265 = vmatprep.subr.mxu0 0.0
      %266 = vmatpush1.msra.mxu0 0.0
      %267 = vmatprep.subr.mxu0 0.0
      %268 = vmatpush1.msra.mxu0 0.0
      %269 = vmatprep.subr.mxu0 0.0
      %270 = vmatpush1.msra.mxu0 0.0
      %271 = vmatprep.subr.mxu0 0.0
      %272 = vmatpush1.msra.mxu0 0.0
      %273 = vmatprep.subr.mxu0 0.0
      %274 = vmatpush1.msra.mxu0 0.0
      %275 = vmatprep.subr.mxu0 0.0
      %276 = vmatpush1.msra.mxu0 0.0
      %277 = vmatprep.subr.mxu0 0.0
      %278 = vmatpush1.msra.mxu0 0.0
      %279 = vmatprep.subr.mxu0 0.0
      %280 = vmatpush1.msra.mxu0 0.0
      %281 = vmatprep.subr.mxu0 0.0
      %282 = vmatpush1.msra.mxu0 0.0
      %283 = vmatprep.subr.mxu0 0.0
      %284 = vmatpush1.msra.mxu0 0.0
      %285 = vmatprep.subr.mxu0 0.0
      %286 = vmatpush1.msra.mxu0 0.0
      %287 = vmatprep.subr.mxu0 0.0
      %288 = vmatpush1.msra.mxu0 0.0
      %289 = vmatprep.subr.mxu0 0.0
      %290 = vmatpush1.msra.mxu0 0.0
      %291 = vmatprep.subr.mxu0 0.0
      %292 = vmatpush1.msra.mxu0 0.0
      %293 = vmatprep.subr.mxu0 0.0
      %294 = vmatpush1.msra.mxu0 0.0
      %295 = vmatprep.subr.mxu0 0.0
      %296 = vmatpush1.msra.mxu0 0.0
      %297 = vmatprep.subr.mxu0 0.0
      %298 = vmatpush1.msra.mxu0 0.0
      %299 = vmatprep.subr.mxu0 0.0
      %300 = vmatpush1.msra.mxu0 0.0
      %301 = vmatprep.subr.mxu0 0.0
      %302 = vmatpush1.msra.mxu0 0.0
      %303 = vmatprep.subr.mxu0 0.0
      %304 = vmatpush1.msra.mxu0 0.0
      %305 = vmatprep.subr.mxu0 0.0
      %306 = vmatpush1.msra.mxu0 0.0
      %307 = vmatprep.subr.mxu0 0.0
      %308 = vmatpush1.msra.mxu0 0.0
      %309 = vmatprep.subr.mxu0 0.0
      %310 = vmatpush1.msra.mxu0 0.0
      %311 = vmatprep.subr.mxu0 0.0
      %312 = vmatpush1.msra.mxu0 0.0
      %313 = vmatprep.subr.mxu0 0.0
      %314 = vmatpush1.msra.mxu0 0.0
      %315 = vmatprep.subr.mxu0 0.0
      %316 = vmatpush1.msra.mxu0 0.0
      %317 = vmatprep.subr.mxu0 0.0
      %318 = vmatpush1.msra.mxu0 0.0
      %319 = vmatprep.subr.mxu0 0.0
      %320 = vmatpush1.msra.mxu0 0.0
      %321 = vmatprep.mubr.f32.mxu0 0.0
      %322 = vmatmul.mubr.f32.gmra.mrb[0].mxu0 %v234
      %v323 = vpop.f32.mrb[0].mxu0
      %v324 = vadd.f32 0.0, %v323
      %v325 = vpop.f32.mrb[0].mxu0
      %326 = vmatprep.mubr.f32.mxu0 0.0
      %327 = vmatmul.mubr.f32.gmra.mrb[0].mxu0 %v237
      %v328 = vpop.f32.mrb[0].mxu0
      %v329 = vadd.f32 0.0, %v328
      %v330 = vpop.f32.mrb[0].mxu0
      %331 = vmatprep.mubr.f32.mxu0 0.0
      %332 = vmatmul.mubr.f32.gmra.mrb[0].mxu0 %v240
      %v333 = vpop.f32.mrb[0].mxu0
      %v334 = vadd.f32 0.0, %v333
      %v335 = vpop.f32.mrb[0].mxu0
      %336 = vmatprep.mubr.f32.mxu0 0.0
      %337 = vmatmul.mubr.f32.gmra.mrb[0].mxu0 %v243
      %v338 = vpop.f32.mrb[0].mxu0
      %v339 = vadd.f32 0.0, %v338
      %v340 = vpop.f32.mrb[0].mxu0
      %341 = vmatprep.mubr.f32.mxu0 0.0
      %342 = vmatmul.mubr.f32.gmra.mrb[0].mxu0 %v246
      %v343 = vpop.f32.mrb[0].mxu0
      %v344 = vadd.f32 0.0, %v343
      %v345 = vpop.f32.mrb[0].mxu0
      %346 = vmatprep.mubr.f32.mxu0 0.0
      %347 = vmatmul.mubr.f32.gmra.mrb[0].mxu0 %v249
      %v348 = vpop.f32.mrb[0].mxu0
      %v349 = vadd.f32 0.0, %v348
      %v350 = vpop.f32.mrb[0].mxu0
      %351 = vmatprep.mubr.f32.mxu0 0.0
      %352 = vmatmul.mubr.f32.gmra.mrb[0].mxu0 %v252
      %v353 = vpop.f32.mrb[0].mxu0
      %v354 = vadd.f32 0.0, %v353
      %v355 = vpop.f32.mrb[0].mxu0
      %356 = vmatprep.mubr.f32.mxu0 0.0
      %357 = vmatmul.mubr.f32.gmra.mrb[0].mxu0 %v255
      %v358 = vpop.f32.mrb[0].mxu0
      %v359 = vadd.f32 0.0, %v358
      %v360 = vpop.f32.mrb[0].mxu0
      %361 = vdwg.mxu0
      %362 = vst.msk [vmem:[#allocation2] sm:$0xff] %vm219, %v324
      %363 = vst.msk [vmem:[#allocation2 + $0x8] sm:$0xff] %vm219, %v329
      %364 = vst.msk [vmem:[#allocation2 + $0x10] sm:$0xff] %vm219, %v334
      %365 = vst.msk [vmem:[#allocation2 + $0x18] sm:$0xff] %vm219, %v339
      %366 = vst.msk [vmem:[#allocation2 + $0x20] sm:$0xff] %vm219, %v344
      %367 = vst.msk [vmem:[#allocation2 + $0x28] sm:$0xff] %vm219, %v349
      %368 = vst.msk [vmem:[#allocation2 + $0x30] sm:$0xff] %vm219, %v354
      %369 = vst.msk [vmem:[#allocation2 + $0x38] sm:$0xff] %vm219, %v359
    $region117: #{tpu_custom_call.1} parent=1 // pred_fallthru
      _
    %v370 = vld [vmem:[#allocation3] sm:$0xff]
    %v371 = vld [vmem:[#allocation24] sm:$0xff]
    %v372 = vld [vmem:[#allocation8] sm:$0xff]
    %v373 = vld [vmem:[#allocation8 + $0x8] sm:$0xff]
    %v374 = vld [vmem:[#allocation8 + $0x10] sm:$0xff]
    %v375 = vld [vmem:[#allocation8 + $0x18] sm:$0xff]
    %v376 = vld [vmem:[#allocation8 + $0x20] sm:$0xff]
    %v377 = vld [vmem:[#allocation8 + $0x28] sm:$0xff]
    %v378 = vld [vmem:[#allocation8 + $0x30] sm:$0xff]
    %v379 = vld [vmem:[#allocation8 + $0x38] sm:$0xff]
    %v380 = vld [vmem:[#allocation9] sm:$0xff]
    %v381 = vld [vmem:[#allocation9 + $0x8] sm:$0xff]
    %v382 = vld [vmem:[#allocation9 + $0x10] sm:$0xff]
    %v383 = vld [vmem:[#allocation9 + $0x18] sm:$0xff]
    %vm384 = vcmask 261120
    %v386 = vsel %vm384, %v371, 0
    %388 = vmatprep.subr.mxu0 0.0
    %389 = vmatpush1.msra.mxu0 %v380
    %390 = vmatprep.subr.mxu0 0.0
    %391 = vmatpush1.msra.mxu0 %v381
    %392 = vmatprep.subr.mxu0 0.0
    %393 = vmatpush1.msra.mxu0 %v382
    %394 = vmatprep.subr.mxu0 0.0
    %395 = vmatpush1.msra.mxu0 %v383
    %396 = vmatprep.subr.mxu0 0.0
    %397 = vmatpush1.msra.mxu0 0.0
    %398 = vmatprep.subr.mxu0 0.0
    %399 = vmatpush1.msra.mxu0 0.0
    %400 = vmatprep.subr.mxu0 0.0
    %401 = vmatpush1.msra.mxu0 0.0
    %402 = vmatprep.subr.mxu0 0.0
    %403 = vmatpush1.msra.mxu0 0.0
    %404 = vmatprep.subr.mxu0 0.0
    %405 = vmatpush1.msra.mxu0 0.0
    %406 = vmatprep.subr.mxu0 0.0
    %407 = vmatpush1.msra.mxu0 0.0
    %408 = vmatprep.subr.mxu0 0.0
    %409 = vmatpush1.msra.mxu0 0.0
    %410 = vmatprep.subr.mxu0 0.0
    %411 = vmatpush1.msra.mxu0 0.0
    %412 = vmatprep.subr.mxu0 0.0
    %413 = vmatpush1.msra.mxu0 0.0
    %414 = vmatprep.subr.mxu0 0.0
    %415 = vmatpush1.msra.mxu0 0.0
    %416 = vmatprep.subr.mxu0 0.0
    %417 = vmatpush1.msra.mxu0 0.0
    %418 = vmatprep.subr.mxu0 0.0
    %419 = vmatpush1.msra.mxu0 0.0
    %420 = vmatprep.subr.mxu0 0.0
    %421 = vmatpush1.msra.mxu0 0.0
    %422 = vmatprep.subr.mxu0 0.0
    %423 = vmatpush1.msra.mxu0 0.0
    %424 = vmatprep.subr.mxu0 0.0
    %425 = vmatpush1.msra.mxu0 0.0
    %426 = vmatprep.subr.mxu0 0.0
    %427 = vmatpush1.msra.mxu0 0.0
    %428 = vmatprep.subr.mxu0 0.0
    %429 = vmatpush1.msra.mxu0 0.0
    %430 = vmatprep.subr.mxu0 0.0
    %431 = vmatpush1.msra.mxu0 0.0
    %432 = vmatprep.subr.mxu0 0.0
    %433 = vmatpush1.msra.mxu0 0.0
    %434 = vmatprep.subr.mxu0 0.0
    %435 = vmatpush1.msra.mxu0 0.0
    %436 = vmatprep.subr.mxu0 0.0
    %437 = vmatpush1.msra.mxu0 0.0
    %438 = vmatprep.subr.mxu0 0.0
    %439 = vmatpush1.msra.mxu0 0.0
    %440 = vmatprep.subr.mxu0 0.0
    %441 = vmatpush1.msra.mxu0 0.0
    %442 = vmatprep.subr.mxu0 0.0
    %443 = vmatpush1.msra.mxu0 0.0
    %444 = vmatprep.subr.mxu0 0.0
    %445 = vmatpush1.msra.mxu0 0.0
    %446 = vmatprep.subr.mxu0 0.0
    %447 = vmatpush1.msra.mxu0 0.0
    %448 = vmatprep.subr.mxu0 0.0
    %449 = vmatpush1.msra.mxu0 0.0
    %450 = vmatprep.subr.mxu0 0.0
    %451 = vmatpush1.msra.mxu0 0.0
    %452 = vmatprep.mubr.f32.mxu0 0.0
    %453 = vmatmul.mubr.f32.gmra.mrb[0].mxu0 %v386
    %v454 = vpop.f32.mrb[0].mxu0
    %v455 = vadd.f32 0.0, %v454
    %v456 = vpop.f32.mrb[0].mxu0
    %457 = vdwg.mxu0
    %v459 = vcombine.high %v455, %v455
    %v461 = vunpack.c.l.s4 1966171168
    %v462 = vunpack.c.0.s8 %v461
    %v463 = vlaneseq
    %v464 = vshrl.u32 %v463, 7
    %v465 = vsub.s32 %v462, %v464
    %v466 = vrot.slane %v455, %v465
    %v468 = vunpack.c.l.s4 1966171168
    %v469 = vunpack.c.0.s8 %v468
    %v470 = vlaneseq
    %v471 = vshrl.u32 %v470, 7
    %v472 = vsub.s32 %v469, %v471
    %v473 = vrot.slane %v459, %v472
    %v474 = vcombine.high %v466, %v466
    %v475 = vcombine.high %v473, %v473
    %v477 = vunpack.c.l.s4 1966171168
    %v478 = vunpack.c.0.s8 %v477
    %v479 = vlaneseq
    %v480 = vshrl.u32 %v479, 7
    %v481 = vsub.s32 %v478, %v480
    %v482 = vrot.slane %v466, %v481
    %v484 = vunpack.c.l.s4 1966171168
    %v485 = vunpack.c.0.s8 %v484
    %v486 = vlaneseq
    %v487 = vshrl.u32 %v486, 7
    %v488 = vsub.s32 %v485, %v487
    %v489 = vrot.slane %v473, %v488
    %v491 = vunpack.c.l.s4 1966171168
    %v492 = vunpack.c.0.s8 %v491
    %v493 = vlaneseq
    %v494 = vshrl.u32 %v493, 7
    %v495 = vsub.s32 %v492, %v494
    %v496 = vrot.slane %v474, %v495
    %v498 = vunpack.c.l.s4 1966171168
    %v499 = vunpack.c.0.s8 %v498
    %v500 = vlaneseq
    %v501 = vshrl.u32 %v500, 7
    %v502 = vsub.s32 %v499, %v501
    %v503 = vrot.slane %v475, %v502
    %v504 = vcombine.high %v482, %v482
    %v505 = vcombine.high %v489, %v489
    %v506 = vcombine.high %v496, %v496
    %v507 = vcombine.high %v503, %v503
    %v508 = vld [vmem:[#allocation2] sm:$0xff]
    %v509 = vld [vmem:[#allocation2 + $0x8] sm:$0xff]
    %v510 = vld [vmem:[#allocation2 + $0x10] sm:$0xff]
    %v511 = vld [vmem:[#allocation2 + $0x18] sm:$0xff]
    %v512 = vld [vmem:[#allocation2 + $0x20] sm:$0xff]
    %v513 = vld [vmem:[#allocation2 + $0x28] sm:$0xff]
    %v514 = vld [vmem:[#allocation2 + $0x30] sm:$0xff]
    %v515 = vld [vmem:[#allocation2 + $0x38] sm:$0xff]
    %v516 = vlaneseq
    %v517 = vshrl.u32 %v516, 7
    %v518 = vsub.s32 0, %v517
    %v519 = vrot.slane %v482, %v518
    %v520 = vlaneseq
    %v521 = vshrl.u32 %v520, 7
    %v522 = vsub.s32 0, %v521
    %v523 = vrot.slane %v496, %v522
    %v524 = vlaneseq
    %v525 = vshrl.u32 %v524, 7
    %v526 = vsub.s32 0, %v525
    %v527 = vrot.slane %v504, %v526
    %v528 = vlaneseq
    %v529 = vshrl.u32 %v528, 7
    %v530 = vsub.s32 0, %v529
    %v531 = vrot.slane %v506, %v530
    %v532 = vlaneseq
    %v533 = vshrl.u32 %v532, 7
    %v534 = vsub.s32 0, %v533
    %v535 = vrot.slane %v489, %v534
    %v536 = vlaneseq
    %v537 = vshrl.u32 %v536, 7
    %v538 = vsub.s32 0, %v537
    %v539 = vrot.slane %v503, %v538
    %v540 = vlaneseq
    %v541 = vshrl.u32 %v540, 7
    %v542 = vsub.s32 0, %v541
    %v543 = vrot.slane %v505, %v542
    %v544 = vlaneseq
    %v545 = vshrl.u32 %v544, 7
    %v546 = vsub.s32 0, %v545
    %v547 = vrot.slane %v507, %v546
    %v556 = vadd.f32 %v519, %v508
    %v557 = vadd.f32 %v523, %v509
    %v558 = vadd.f32 %v527, %v510
    %v559 = vadd.f32 %v531, %v511
    %v560 = vadd.f32 %v535, %v512
    %v561 = vadd.f32 %v539, %v513
    %v562 = vadd.f32 %v543, %v514
    %v563 = vadd.f32 %v547, %v515
    %v564 = vld [vmem:[%s5] sm:$0x1]
    %v566 = vlaneseq
    %v567 = vshrl.u32 %v566, 7
    %v568 = vsub.s32 0, %v567
    %v569 = vrot.slane %v564, %v568
    %v571 = vadd.f32 %v556, %v569
    %v572 = vadd.f32 %v557, %v569
    %v573 = vadd.f32 %v558, %v569
    %v574 = vadd.f32 %v559, %v569
    %v575 = vadd.f32 %v560, %v569
    %v576 = vadd.f32 %v561, %v569
    %v577 = vadd.f32 %v562, %v569
    %v578 = vadd.f32 %v563, %v569
    %v579 = vtanh.pop %v571
    %v580 = vtanh.pop %v572
    %v581 = vtanh.pop %v573
    %v582 = vtanh.pop %v574
    %v583 = vtanh.pop %v575
    %v584 = vtanh.pop %v576
    %v585 = vtanh.pop %v577
    %v586 = vtanh.pop %v578
    %v587 = vld [vmem:[#allocation12] sm:$0x1]
    %v589 = vlaneseq
    %v590 = vshrl.u32 %v589, 7
    %v591 = vsub.s32 0, %v590
    %v592 = vrot.slane %v587, %v591
    %v594 = vmul.f32 %v579, %v592
    %v595 = vmul.f32 %v580, %v592
    %v596 = vmul.f32 %v581, %v592
    %v597 = vmul.f32 %v582, %v592
    %v598 = vmul.f32 %v583, %v592
    %v599 = vmul.f32 %v584, %v592
    %v600 = vmul.f32 %v585, %v592
    %v601 = vmul.f32 %v586, %v592
    %v602 = vsel %vm384, %v594, 0.0
    %603 = vadd.xlane.f32.xlu0 %v602
    %v604 = vpop.xlane.xlu0 %603
    %v605 = vsel %vm384, %v595, 0.0
    %606 = vadd.xlane.f32.xlu0 %v605
    %v607 = vpop.xlane.xlu0 %606
    %v608 = vsel %vm384, %v596, 0.0
    %609 = vadd.xlane.f32.xlu0 %v608
    %v610 = vpop.xlane.xlu0 %609
    %v611 = vsel %vm384, %v597, 0.0
    %612 = vadd.xlane.f32.xlu0 %v611
    %v613 = vpop.xlane.xlu0 %612
    %v614 = vsel %vm384, %v598, 0.0
    %615 = vadd.xlane.f32.xlu0 %v614
    %v616 = vpop.xlane.xlu0 %615
    %v617 = vsel %vm384, %v599, 0.0
    %618 = vadd.xlane.f32.xlu0 %v617
    %v619 = vpop.xlane.xlu0 %618
    %v620 = vsel %vm384, %v600, 0.0
    %621 = vadd.xlane.f32.xlu0 %v620
    %v622 = vpop.xlane.xlu0 %621
    %v623 = vsel %vm384, %v601, 0.0
    %624 = vadd.xlane.f32.xlu0 %v623
    %v625 = vpop.xlane.xlu0 %624
    %v634 = vlaneseq
    %v635 = vand.u32 %v634, 127
    %v636 = vlaneseq
    %v637 = vshrl.u32 %v636, 7
    %v638 = vsub.s32 %v635, %v637
    %v639 = vrot.slane %v604, %v638
    %v640 = vlaneseq
    %v641 = vshrl.u32 %v640, 7
    %v642 = vsub.s32 %v635, %v641
    %v643 = vrot.slane %v607, %v642
    %v644 = vlaneseq
    %v645 = vshrl.u32 %v644, 7
    %v646 = vsub.s32 %v635, %v645
    %v647 = vrot.slane %v610, %v646
    %v648 = vlaneseq
    %v649 = vshrl.u32 %v648, 7
    %v650 = vsub.s32 %v635, %v649
    %v651 = vrot.slane %v613, %v650
    %v652 = vlaneseq
    %v653 = vshrl.u32 %v652, 7
    %v654 = vsub.s32 %v635, %v653
    %v655 = vrot.slane %v616, %v654
    %v656 = vlaneseq
    %v657 = vshrl.u32 %v656, 7
    %v658 = vsub.s32 %v635, %v657
    %v659 = vrot.slane %v619, %v658
    %v660 = vlaneseq
    %v661 = vshrl.u32 %v660, 7
    %v662 = vsub.s32 %v635, %v661
    %v663 = vrot.slane %v622, %v662
    %v664 = vlaneseq
    %v665 = vshrl.u32 %v664, 7
    %v666 = vsub.s32 %v635, %v665
    %v667 = vrot.slane %v625, %v666
    %vm668 = vcmask 1041409
    %v669 = vsel %vm668, %v643, %v639
    %vm670 = vcmask 1042434
    %v671 = vsel %vm670, %v647, %v669
    %vm672 = vcmask 1043459
    %v673 = vsel %vm672, %v651, %v671
    %vm674 = vcmask 1044484
    %v675 = vsel %vm674, %v655, %v673
    %vm676 = vcmask 1045509
    %v677 = vsel %vm676, %v659, %v675
    %vm678 = vcmask 1046534
    %v679 = vsel %vm678, %v663, %v677
    %vm680 = vcmask 1047559
    %v681 = vsel %vm680, %v667, %v679
    %vm683 = vcmask 64512
    %v684 = vsel %vm683, %v681, -inf
    %685 = vmax.xlane.f32.xlu0 %v684
    %v686 = vpop.xlane.xlu0 %685
    %v688 = vlaneseq
    %v689 = vshrl.u32 %v688, 7
    %v690 = vsub.s32 0, %v689
    %v691 = vrot.slane %v686, %v690
    %v692 = vlaneseq
    %v693 = vshrl.u32 %v692, 7
    %v694 = vsub.s32 1, %v693
    %v695 = vrot.slane %v686, %v694
    %v696 = vlaneseq
    %v697 = vshrl.u32 %v696, 7
    %v698 = vsub.s32 2, %v697
    %v699 = vrot.slane %v686, %v698
    %v700 = vlaneseq
    %v701 = vshrl.u32 %v700, 7
    %v702 = vsub.s32 3, %v701
    %v703 = vrot.slane %v686, %v702
    %v704 = vlaneseq
    %v705 = vshrl.u32 %v704, 7
    %v706 = vsub.s32 4, %v705
    %v707 = vrot.slane %v686, %v706
    %v708 = vlaneseq
    %v709 = vshrl.u32 %v708, 7
    %v710 = vsub.s32 5, %v709
    %v711 = vrot.slane %v686, %v710
    %v712 = vlaneseq
    %v713 = vshrl.u32 %v712, 7
    %v714 = vsub.s32 6, %v713
    %v715 = vrot.slane %v686, %v714
    %v716 = vlaneseq
    %v717 = vshrl.u32 %v716, 7
    %v718 = vsub.s32 7, %v717
    %v719 = vrot.slane %v686, %v718
    %v728 = vsub.f32 %v604, %v691
    %v729 = vsub.f32 %v607, %v695
    %v730 = vsub.f32 %v610, %v699
    %v731 = vsub.f32 %v613, %v703
    %v732 = vsub.f32 %v616, %v707
    %v733 = vsub.f32 %v619, %v711
    %v734 = vsub.f32 %v622, %v715
    %v735 = vsub.f32 %v625, %v719
    %v736 = vmul.f32 %v728, 1.442695
    %v737 = vpow.pop %v736
    %v738 = vmul.f32 %v729, 1.442695
    %v739 = vpow.pop %v738
    %v740 = vmul.f32 %v730, 1.442695
    %v741 = vpow.pop %v740
    %v742 = vmul.f32 %v731, 1.442695
    %v743 = vpow.pop %v742
    %v744 = vmul.f32 %v732, 1.442695
    %v745 = vpow.pop %v744
    %v746 = vmul.f32 %v733, 1.442695
    %v747 = vpow.pop %v746
    %v748 = vmul.f32 %v734, 1.442695
    %v749 = vpow.pop %v748
    %v750 = vmul.f32 %v735, 1.442695
    %v751 = vpow.pop %v750
    %760 = vset.pattern.permute.xlu0 0
    %761 = vperm.xlu0 %760, %v737
    %v762 = vpop.permute.xlu0 %761
    %763 = vset.pattern.permute.xlu0 0
    %764 = vperm.xlu0 %763, %v739
    %v765 = vpop.permute.xlu0 %764
    %766 = vset.pattern.permute.xlu0 0
    %767 = vperm.xlu0 %766, %v741
    %v768 = vpop.permute.xlu0 %767
    %769 = vset.pattern.permute.xlu0 0
    %770 = vperm.xlu0 %769, %v743
    %v771 = vpop.permute.xlu0 %770
    %772 = vset.pattern.permute.xlu0 0
    %773 = vperm.xlu0 %772, %v745
    %v774 = vpop.permute.xlu0 %773
    %775 = vset.pattern.permute.xlu0 0
    %776 = vperm.xlu0 %775, %v747
    %v777 = vpop.permute.xlu0 %776
    %778 = vset.pattern.permute.xlu0 0
    %779 = vperm.xlu0 %778, %v749
    %v780 = vpop.permute.xlu0 %779
    %781 = vset.pattern.permute.xlu0 0
    %782 = vperm.xlu0 %781, %v751
    %v783 = vpop.permute.xlu0 %782
    %v784 = vlaneseq
    %v785 = vshrl.u32 %v784, 7
    %v786 = vsub.s32 %v635, %v785
    %v787 = vrot.slane %v762, %v786
    %v788 = vlaneseq
    %v789 = vshrl.u32 %v788, 7
    %v790 = vsub.s32 %v635, %v789
    %v791 = vrot.slane %v765, %v790
    %v792 = vlaneseq
    %v793 = vshrl.u32 %v792, 7
    %v794 = vsub.s32 %v635, %v793
    %v795 = vrot.slane %v768, %v794
    %v796 = vlaneseq
    %v797 = vshrl.u32 %v796, 7
    %v798 = vsub.s32 %v635, %v797
    %v799 = vrot.slane %v771, %v798
    %v800 = vlaneseq
    %v801 = vshrl.u32 %v800, 7
    %v802 = vsub.s32 %v635, %v801
    %v803 = vrot.slane %v774, %v802
    %v804 = vlaneseq
    %v805 = vshrl.u32 %v804, 7
    %v806 = vsub.s32 %v635, %v805
    %v807 = vrot.slane %v777, %v806
    %v808 = vlaneseq
    %v809 = vshrl.u32 %v808, 7
    %v810 = vsub.s32 %v635, %v809
    %v811 = vrot.slane %v780, %v810
    %v812 = vlaneseq
    %v813 = vshrl.u32 %v812, 7
    %v814 = vsub.s32 %v635, %v813
    %v815 = vrot.slane %v783, %v814
    %v816 = vsel %vm668, %v791, %v787
    %v817 = vsel %vm670, %v795, %v816
    %v818 = vsel %vm672, %v799, %v817
    %v819 = vsel %vm674, %v803, %v818
    %v820 = vsel %vm676, %v807, %v819
    %v821 = vsel %vm678, %v811, %v820
    %v822 = vsel %vm680, %v815, %v821
    %v824 = vsel %vm683, %v822, 0.0
    %825 = vadd.xlane.f32.xlu0 %v824
    %v826 = vpop.xlane.xlu0 %825
    %v828 = vlaneseq
    %v829 = vshrl.u32 %v828, 7
    %v830 = vsub.s32 0, %v829
    %v831 = vrot.slane %v826, %v830
    %v832 = vlaneseq
    %v833 = vshrl.u32 %v832, 7
    %v834 = vsub.s32 1, %v833
    %v835 = vrot.slane %v826, %v834
    %v836 = vlaneseq
    %v837 = vshrl.u32 %v836, 7
    %v838 = vsub.s32 2, %v837
    %v839 = vrot.slane %v826, %v838
    %v840 = vlaneseq
    %v841 = vshrl.u32 %v840, 7
    %v842 = vsub.s32 3, %v841
    %v843 = vrot.slane %v826, %v842
    %v844 = vlaneseq
    %v845 = vshrl.u32 %v844, 7
    %v846 = vsub.s32 4, %v845
    %v847 = vrot.slane %v826, %v846
    %v848 = vlaneseq
    %v849 = vshrl.u32 %v848, 7
    %v850 = vsub.s32 5, %v849
    %v851 = vrot.slane %v826, %v850
    %v852 = vlaneseq
    %v853 = vshrl.u32 %v852, 7
    %v854 = vsub.s32 6, %v853
    %v855 = vrot.slane %v826, %v854
    %v856 = vlaneseq
    %v857 = vshrl.u32 %v856, 7
    %v858 = vsub.s32 7, %v857
    %v859 = vrot.slane %v826, %v858
    %v868 = vrcp.pop %v831
    %v869 = vmul.f32 %v737, %v868
    %v870 = vrcp.pop %v835
    %v871 = vmul.f32 %v739, %v870
    %v872 = vrcp.pop %v839
    %v873 = vmul.f32 %v741, %v872
    %v874 = vrcp.pop %v843
    %v875 = vmul.f32 %v743, %v874
    %v876 = vrcp.pop %v847
    %v877 = vmul.f32 %v745, %v876
    %v878 = vrcp.pop %v851
    %v879 = vmul.f32 %v747, %v878
    %v880 = vrcp.pop %v855
    %v881 = vmul.f32 %v749, %v880
    %v882 = vrcp.pop %v859
    %v883 = vmul.f32 %v751, %v882
    %885 = vset.pattern.permute.xlu0 0
    %886 = vperm.xlu0 %885, %v869
    %v887 = vpop.permute.xlu0 %886
    %890 = vset.pattern.permute.xlu0 0
    %891 = vperm.xlu0 %890, %v871
    %v892 = vpop.permute.xlu0 %891
    %895 = vset.pattern.permute.xlu0 0
    %896 = vperm.xlu0 %895, %v873
    %v897 = vpop.permute.xlu0 %896
    %900 = vset.pattern.permute.xlu0 0
    %901 = vperm.xlu0 %900, %v875
    %v902 = vpop.permute.xlu0 %901
    %905 = vset.pattern.permute.xlu0 0
    %906 = vperm.xlu0 %905, %v877
    %v907 = vpop.permute.xlu0 %906
    %910 = vset.pattern.permute.xlu0 0
    %911 = vperm.xlu0 %910, %v879
    %v912 = vpop.permute.xlu0 %911
    %915 = vset.pattern.permute.xlu0 0
    %916 = vperm.xlu0 %915, %v881
    %v917 = vpop.permute.xlu0 %916
    %920 = vset.pattern.permute.xlu0 0
    %921 = vperm.xlu0 %920, %v883
    %v922 = vpop.permute.xlu0 %921
    %v924 = vmul.f32 %v887, %v372
    %v925 = vmul.f32 %v892, %v373
    %v926 = vmul.f32 %v897, %v374
    %v927 = vmul.f32 %v902, %v375
    %v928 = vmul.f32 %v907, %v376
    %v929 = vmul.f32 %v912, %v377
    %v930 = vmul.f32 %v917, %v378
    %v931 = vmul.f32 %v922, %v379
    %v932 = vsel %vm384, %v924, 0.0
    %v933 = vrot.slane %v932, 4
    %v934 = vadd.f32 %v932, %v933
    %v935 = vrot.slane %v934, 2
    %v936 = vadd.f32 %v934, %v935
    %v937 = vrot.slane %v936, 1
    %v938 = vadd.f32 %v936, %v937
    %v939 = vsel %vm384, %v925, 0.0
    %v940 = vrot.slane %v939, 4
    %v941 = vadd.f32 %v939, %v940
    %v942 = vrot.slane %v941, 2
    %v943 = vadd.f32 %v941, %v942
    %v944 = vrot.slane %v943, 1
    %v945 = vadd.f32 %v943, %v944
    %v946 = vsel %vm384, %v926, 0.0
    %v947 = vrot.slane %v946, 4
    %v948 = vadd.f32 %v946, %v947
    %v949 = vrot.slane %v948, 2
    %v950 = vadd.f32 %v948, %v949
    %v951 = vrot.slane %v950, 1
    %v952 = vadd.f32 %v950, %v951
    %v953 = vsel %vm384, %v927, 0.0
    %v954 = vrot.slane %v953, 4
    %v955 = vadd.f32 %v953, %v954
    %v956 = vrot.slane %v955, 2
    %v957 = vadd.f32 %v955, %v956
    %v958 = vrot.slane %v957, 1
    %v959 = vadd.f32 %v957, %v958
    %v960 = vsel %vm384, %v928, 0.0
    %v961 = vrot.slane %v960, 4
    %v962 = vadd.f32 %v960, %v961
    %v963 = vrot.slane %v962, 2
    %v964 = vadd.f32 %v962, %v963
    %v965 = vrot.slane %v964, 1
    %v966 = vadd.f32 %v964, %v965
    %v967 = vsel %vm384, %v929, 0.0
    %v968 = vrot.slane %v967, 4
    %v969 = vadd.f32 %v967, %v968
    %v970 = vrot.slane %v969, 2
    %v971 = vadd.f32 %v969, %v970
    %v972 = vrot.slane %v971, 1
    %v973 = vadd.f32 %v971, %v972
    %v974 = vsel %vm384, %v930, 0.0
    %v975 = vrot.slane %v974, 4
    %v976 = vadd.f32 %v974, %v975
    %v977 = vrot.slane %v976, 2
    %v978 = vadd.f32 %v976, %v977
    %v979 = vrot.slane %v978, 1
    %v980 = vadd.f32 %v978, %v979
    %v981 = vsel %vm384, %v931, 0.0
    %v982 = vrot.slane %v981, 4
    %v983 = vadd.f32 %v981, %v982
    %v984 = vrot.slane %v983, 2
    %v985 = vadd.f32 %v983, %v984
    %v986 = vrot.slane %v985, 1
    %v987 = vadd.f32 %v985, %v986
    %v988 = vld [vmem:[#allocation14] sm:$0xff]
    %v989 = vld [vmem:[#allocation14 + $0x8] sm:$0xff]
    %v990 = vld [vmem:[#allocation15] sm:$0xff]
    %v991 = vld [vmem:[#allocation15 + $0x8] sm:$0xff]
    %v992 = vld [vmem:[#allocation15 + $0x10] sm:$0xff]
    %v993 = vld [vmem:[#allocation15 + $0x18] sm:$0xff]
    %v1002 = vsel %vm668, %v945, %v938
    %v1003 = vsel %vm670, %v952, %v1002
    %v1004 = vsel %vm672, %v959, %v1003
    %v1005 = vsel %vm674, %v966, %v1004
    %v1006 = vsel %vm676, %v973, %v1005
    %v1007 = vsel %vm678, %v980, %v1006
    %v1008 = vsel %vm680, %v987, %v1007
    %v1009 = vsel %vm384, %v1008, 0
    %1011 = vmatprep.subr.mxu0 0.0
    %1012 = vmatpush1.msra.mxu0 %v990
    %1013 = vmatprep.subr.mxu0 0.0
    %1014 = vmatpush1.msra.mxu0 %v991
    %1015 = vmatprep.subr.mxu0 0.0
    %1016 = vmatpush1.msra.mxu0 %v992
    %1017 = vmatprep.subr.mxu0 0.0
    %1018 = vmatpush1.msra.mxu0 %v993
    %1019 = vmatprep.subr.mxu0 0.0
    %1020 = vmatpush1.msra.mxu0 0.0
    %1021 = vmatprep.subr.mxu0 0.0
    %1022 = vmatpush1.msra.mxu0 0.0
    %1023 = vmatprep.subr.mxu0 0.0
    %1024 = vmatpush1.msra.mxu0 0.0
    %1025 = vmatprep.subr.mxu0 0.0
    %1026 = vmatpush1.msra.mxu0 0.0
    %1027 = vmatprep.subr.mxu0 0.0
    %1028 = vmatpush1.msra.mxu0 0.0
    %1029 = vmatprep.subr.mxu0 0.0
    %1030 = vmatpush1.msra.mxu0 0.0
    %1031 = vmatprep.subr.mxu0 0.0
    %1032 = vmatpush1.msra.mxu0 0.0
    %1033 = vmatprep.subr.mxu0 0.0
    %1034 = vmatpush1.msra.mxu0 0.0
    %1035 = vmatprep.subr.mxu0 0.0
    %1036 = vmatpush1.msra.mxu0 0.0
    %1037 = vmatprep.subr.mxu0 0.0
    %1038 = vmatpush1.msra.mxu0 0.0
    %1039 = vmatprep.subr.mxu0 0.0
    %1040 = vmatpush1.msra.mxu0 0.0
    %1041 = vmatprep.subr.mxu0 0.0
    %1042 = vmatpush1.msra.mxu0 0.0
    %1043 = vmatprep.subr.mxu0 0.0
    %1044 = vmatpush1.msra.mxu0 0.0
    %1045 = vmatprep.subr.mxu0 0.0
    %1046 = vmatpush1.msra.mxu0 0.0
    %1047 = vmatprep.subr.mxu0 0.0
    %1048 = vmatpush1.msra.mxu0 0.0
    %1049 = vmatprep.subr.mxu0 0.0
    %1050 = vmatpush1.msra.mxu0 0.0
    %1051 = vmatprep.subr.mxu0 0.0
    %1052 = vmatpush1.msra.mxu0 0.0
    %1053 = vmatprep.subr.mxu0 0.0
    %1054 = vmatpush1.msra.mxu0 0.0
    %1055 = vmatprep.subr.mxu0 0.0
    %1056 = vmatpush1.msra.mxu0 0.0
    %1057 = vmatprep.subr.mxu0 0.0
    %1058 = vmatpush1.msra.mxu0 0.0
    %1059 = vmatprep.subr.mxu0 0.0
    %1060 = vmatpush1.msra.mxu0 0.0
    %1061 = vmatprep.subr.mxu0 0.0
    %1062 = vmatpush1.msra.mxu0 0.0
    %1063 = vmatprep.subr.mxu0 0.0
    %1064 = vmatpush1.msra.mxu0 0.0
    %1065 = vmatprep.subr.mxu0 0.0
    %1066 = vmatpush1.msra.mxu0 0.0
    %1067 = vmatprep.subr.mxu0 0.0
    %1068 = vmatpush1.msra.mxu0 0.0
    %1069 = vmatprep.subr.mxu0 0.0
    %1070 = vmatpush1.msra.mxu0 0.0
    %1071 = vmatprep.subr.mxu0 0.0
    %1072 = vmatpush1.msra.mxu0 0.0
    %1073 = vmatprep.subr.mxu0 0.0
    %1074 = vmatpush1.msra.mxu0 0.0
    %1075 = vmatprep.mubr.f32.mxu0 0.0
    %1076 = vmatmul.mubr.f32.gmra.mrb[0].mxu0 %v1009
    %v1077 = vpop.f32.mrb[0].mxu0
    %v1078 = vadd.f32 0.0, %v1077
    %v1079 = vpop.f32.mrb[0].mxu0
    %1080 = vdwg.mxu0
    %vm1081 = vcmask 130048
    %v1083 = vsel %vm1081, %v370, 0
    %1085 = vmatprep.subr.mxu0 0.0
    %1086 = vmatpush1.msra.mxu0 %v988
    %1087 = vmatprep.subr.mxu0 0.0
    %1088 = vmatpush1.msra.mxu0 %v989
    %1089 = vmatprep.subr.mxu0 0.0
    %1090 = vmatpush1.msra.mxu0 0.0
    %1091 = vmatprep.subr.mxu0 0.0
    %1092 = vmatpush1.msra.mxu0 0.0
    %1093 = vmatprep.subr.mxu0 0.0
    %1094 = vmatpush1.msra.mxu0 0.0
    %1095 = vmatprep.subr.mxu0 0.0
    %1096 = vmatpush1.msra.mxu0 0.0
    %1097 = vmatprep.subr.mxu0 0.0
    %1098 = vmatpush1.msra.mxu0 0.0
    %1099 = vmatprep.subr.mxu0 0.0
    %1100 = vmatpush1.msra.mxu0 0.0
    %1101 = vmatprep.subr.mxu0 0.0
    %1102 = vmatpush1.msra.mxu0 0.0
    %1103 = vmatprep.subr.mxu0 0.0
    %1104 = vmatpush1.msra.mxu0 0.0
    %1105 = vmatprep.subr.mxu0 0.0
    %1106 = vmatpush1.msra.mxu0 0.0
    %1107 = vmatprep.subr.mxu0 0.0
    %1108 = vmatpush1.msra.mxu0 0.0
    %1109 = vmatprep.subr.mxu0 0.0
    %1110 = vmatpush1.msra.mxu0 0.0
    %1111 = vmatprep.subr.mxu0 0.0
    %1112 = vmatpush1.msra.mxu0 0.0
    %1113 = vmatprep.subr.mxu0 0.0
    %1114 = vmatpush1.msra.mxu0 0.0
    %1115 = vmatprep.subr.mxu0 0.0
    %1116 = vmatpush1.msra.mxu0 0.0
    %1117 = vmatprep.subr.mxu0 0.0
    %1118 = vmatpush1.msra.mxu0 0.0
    %1119 = vmatprep.subr.mxu0 0.0
    %1120 = vmatpush1.msra.mxu0 0.0
    %1121 = vmatprep.subr.mxu0 0.0
    %1122 = vmatpush1.msra.mxu0 0.0
    %1123 = vmatprep.subr.mxu0 0.0
    %1124 = vmatpush1.msra.mxu0 0.0
    %1125 = vmatprep.subr.mxu0 0.0
    %1126 = vmatpush1.msra.mxu0 0.0
    %1127 = vmatprep.subr.mxu0 0.0
    %1128 = vmatpush1.msra.mxu0 0.0
    %1129 = vmatprep.subr.mxu0 0.0
    %1130 = vmatpush1.msra.mxu0 0.0
    %1131 = vmatprep.subr.mxu0 0.0
    %1132 = vmatpush1.msra.mxu0 0.0
    %1133 = vmatprep.subr.mxu0 0.0
    %1134 = vmatpush1.msra.mxu0 0.0
    %1135 = vmatprep.subr.mxu0 0.0
    %1136 = vmatpush1.msra.mxu0 0.0
    %1137 = vmatprep.subr.mxu0 0.0
    %1138 = vmatpush1.msra.mxu0 0.0
    %1139 = vmatprep.subr.mxu0 0.0
    %1140 = vmatpush1.msra.mxu0 0.0
    %1141 = vmatprep.subr.mxu0 0.0
    %1142 = vmatpush1.msra.mxu0 0.0
    %1143 = vmatprep.subr.mxu0 0.0
    %1144 = vmatpush1.msra.mxu0 0.0
    %1145 = vmatprep.subr.mxu0 0.0
    %1146 = vmatpush1.msra.mxu0 0.0
    %1147 = vmatprep.subr.mxu0 0.0
    %1148 = vmatpush1.msra.mxu0 0.0
    %1149 = vmatprep.mubr.f32.mxu0 0.0
    %1150 = vmatmul.mubr.f32.gmra.mrb[0].mxu0 %v1083
    %v1151 = vpop.f32.mrb[0].mxu0
    %v1152 = vadd.f32 %v1078, %v1151
    %v1153 = vpop.f32.mrb[0].mxu0
    %1154 = vdwg.mxu0
    %v1155 = vld [vmem:[#allocation17] sm:$0x1]
    %v1157 = vlaneseq
    %v1158 = vshrl.u32 %v1157, 7
    %v1159 = vsub.s32 0, %v1158
    %v1160 = vrot.slane %v1155, %v1159
    %v1162 = vadd.f32 %v1152, %v1160
    %v1163 = vld [vmem:[#allocation18] sm:$0xff]
    %v1164 = vld [vmem:[#allocation18 + $0x8] sm:$0xff]
    %v1165 = vld [vmem:[#allocation18 + $0x10] sm:$0xff]
    %v1166 = vld [vmem:[#allocation18 + $0x18] sm:$0xff]
    %v1167 = vld [vmem:[#allocation20] sm:$0x1]
    %v1169 = vlaneseq
    %v1170 = vshrl.u32 %v1169, 7
    %v1171 = vsub.s32 0, %v1170
    %v1172 = vrot.slane %v1167, %v1171
    %1174 = vmatprep.subr.mxu0 0.0
    %1175 = vmatpush1.msra.mxu0 %v1163
    %1176 = vmatprep.subr.mxu0 0.0
    %1177 = vmatpush1.msra.mxu0 %v1164
    %1178 = vmatprep.subr.mxu0 0.0
    %1179 = vmatpush1.msra.mxu0 %v1165
    %1180 = vmatprep.subr.mxu0 0.0
    %1181 = vmatpush1.msra.mxu0 %v1166
    %1182 = vmatprep.subr.mxu0 0.0
    %1183 = vmatpush1.msra.mxu0 0.0
    %1184 = vmatprep.subr.mxu0 0.0
    %1185 = vmatpush1.msra.mxu0 0.0
    %1186 = vmatprep.subr.mxu0 0.0
    %1187 = vmatpush1.msra.mxu0 0.0
    %1188 = vmatprep.subr.mxu0 0.0
    %1189 = vmatpush1.msra.mxu0 0.0
    %1190 = vmatprep.subr.mxu0 0.0
    %1191 = vmatpush1.msra.mxu0 0.0
    %1192 = vmatprep.subr.mxu0 0.0
    %1193 = vmatpush1.msra.mxu0 0.0
    %1194 = vmatprep.subr.mxu0 0.0
    %1195 = vmatpush1.msra.mxu0 0.0
    %1196 = vmatprep.subr.mxu0 0.0
    %1197 = vmatpush1.msra.mxu0 0.0
    %1198 = vmatprep.subr.mxu0 0.0
    %1199 = vmatpush1.msra.mxu0 0.0
    %1200 = vmatprep.subr.mxu0 0.0
    %1201 = vmatpush1.msra.mxu0 0.0
    %1202 = vmatprep.subr.mxu0 0.0
    %1203 = vmatpush1.msra.mxu0 0.0
    %1204 = vmatprep.subr.mxu0 0.0
    %1205 = vmatpush1.msra.mxu0 0.0
    %1206 = vmatprep.subr.mxu0 0.0
    %1207 = vmatpush1.msra.mxu0 0.0
    %1208 = vmatprep.subr.mxu0 0.0
    %1209 = vmatpush1.msra.mxu0 0.0
    %1210 = vmatprep.subr.mxu0 0.0
    %1211 = vmatpush1.msra.mxu0 0.0
    %1212 = vmatprep.subr.mxu0 0.0
    %1213 = vmatpush1.msra.mxu0 0.0
    %1214 = vmatprep.subr.mxu0 0.0
    %1215 = vmatpush1.msra.mxu0 0.0
    %1216 = vmatprep.subr.mxu0 0.0
    %1217 = vmatpush1.msra.mxu0 0.0
    %1218 = vmatprep.subr.mxu0 0.0
    %1219 = vmatpush1.msra.mxu0 0.0
    %1220 = vmatprep.subr.mxu0 0.0
    %1221 = vmatpush1.msra.mxu0 0.0
    %1222 = vmatprep.subr.mxu0 0.0
    %1223 = vmatpush1.msra.mxu0 0.0
    %1224 = vmatprep.subr.mxu0 0.0
    %1225 = vmatpush1.msra.mxu0 0.0
    %1226 = vmatprep.subr.mxu0 0.0
    %1227 = vmatpush1.msra.mxu0 0.0
    %1228 = vmatprep.subr.mxu0 0.0
    %1229 = vmatpush1.msra.mxu0 0.0
    %1230 = vmatprep.subr.mxu0 0.0
    %1231 = vmatpush1.msra.mxu0 0.0
    %1232 = vmatprep.subr.mxu0 0.0
    %1233 = vmatpush1.msra.mxu0 0.0
    %1234 = vmatprep.subr.mxu0 0.0
    %1235 = vmatpush1.msra.mxu0 0.0
    %1236 = vmatprep.subr.mxu0 0.0
    %1237 = vmatpush1.msra.mxu0 0.0
    %1238 = vmatprep.mubr.f32.mxu0 0.0
    %1239 = vmatmul.mubr.f32.gmra.mrb[0].mxu0 %v386
    %v1240 = vpop.f32.mrb[0].mxu0
    %v1241 = vadd.f32 %v1172, %v1240
    %v1242 = vpop.f32.mrb[0].mxu0
    %1243 = vdwg.mxu0
    %s1244 = scalar_lea.vmem [#allocation14], 16
    %v1245 = vld [vmem:[%s1244] sm:$0xff]
    %v1246 = vld [vmem:[%s1244 + $0x8] sm:$0xff]
    %s1247 = scalar_lea.vmem [#allocation15], 32
    %v1248 = vld [vmem:[%s1247] sm:$0xff]
    %v1249 = vld [vmem:[%s1247 + $0x8] sm:$0xff]
    %v1250 = vld [vmem:[%s1247 + $0x10] sm:$0xff]
    %v1251 = vld [vmem:[%s1247 + $0x18] sm:$0xff]
    %1252 = vmatprep.subr.mxu0 0.0
    %1253 = vmatpush1.msra.mxu0 %v1248
    %1254 = vmatprep.subr.mxu0 0.0
    %1255 = vmatpush1.msra.mxu0 %v1249
    %1256 = vmatprep.subr.mxu0 0.0
    %1257 = vmatpush1.msra.mxu0 %v1250
    %1258 = vmatprep.subr.mxu0 0.0
    %1259 = vmatpush1.msra.mxu0 %v1251
    %1260 = vmatprep.subr.mxu0 0.0
    %1261 = vmatpush1.msra.mxu0 0.0
    %1262 = vmatprep.subr.mxu0 0.0
    %1263 = vmatpush1.msra.mxu0 0.0
    %1264 = vmatprep.subr.mxu0 0.0
    %1265 = vmatpush1.msra.mxu0 0.0
    %1266 = vmatprep.subr.mxu0 0.0
    %1267 = vmatpush1.msra.mxu0 0.0
    %1268 = vmatprep.subr.mxu0 0.0
    %1269 = vmatpush1.msra.mxu0 0.0
    %1270 = vmatprep.subr.mxu0 0.0
    %1271 = vmatpush1.msra.mxu0 0.0
    %1272 = vmatprep.subr.mxu0 0.0
    %1273 = vmatpush1.msra.mxu0 0.0
    %1274 = vmatprep.subr.mxu0 0.0
    %1275 = vmatpush1.msra.mxu0 0.0
    %1276 = vmatprep.subr.mxu0 0.0
    %1277 = vmatpush1.msra.mxu0 0.0
    %1278 = vmatprep.subr.mxu0 0.0
    %1279 = vmatpush1.msra.mxu0 0.0
    %1280 = vmatprep.subr.mxu0 0.0
    %1281 = vmatpush1.msra.mxu0 0.0
    %1282 = vmatprep.subr.mxu0 0.0
    %1283 = vmatpush1.msra.mxu0 0.0
    %1284 = vmatprep.subr.mxu0 0.0
    %1285 = vmatpush1.msra.mxu0 0.0
    %1286 = vmatprep.subr.mxu0 0.0
    %1287 = vmatpush1.msra.mxu0 0.0
    %1288 = vmatprep.subr.mxu0 0.0
    %1289 = vmatpush1.msra.mxu0 0.0
    %1290 = vmatprep.subr.mxu0 0.0
    %1291 = vmatpush1.msra.mxu0 0.0
    %1292 = vmatprep.subr.mxu0 0.0
    %1293 = vmatpush1.msra.mxu0 0.0
    %1294 = vmatprep.subr.mxu0 0.0
    %1295 = vmatpush1.msra.mxu0 0.0
    %1296 = vmatprep.subr.mxu0 0.0
    %1297 = vmatpush1.msra.mxu0 0.0
    %1298 = vmatprep.subr.mxu0 0.0
    %1299 = vmatpush1.msra.mxu0 0.0
    %1300 = vmatprep.subr.mxu0 0.0
    %1301 = vmatpush1.msra.mxu0 0.0
    %1302 = vmatprep.subr.mxu0 0.0
    %1303 = vmatpush1.msra.mxu0 0.0
    %1304 = vmatprep.subr.mxu0 0.0
    %1305 = vmatpush1.msra.mxu0 0.0
    %1306 = vmatprep.subr.mxu0 0.0
    %1307 = vmatpush1.msra.mxu0 0.0
    %1308 = vmatprep.subr.mxu0 0.0
    %1309 = vmatpush1.msra.mxu0 0.0
    %1310 = vmatprep.subr.mxu0 0.0
    %1311 = vmatpush1.msra.mxu0 0.0
    %1312 = vmatprep.subr.mxu0 0.0
    %1313 = vmatpush1.msra.mxu0 0.0
    %1314 = vmatprep.subr.mxu0 0.0
    %1315 = vmatpush1.msra.mxu0 0.0
    %1316 = vmatprep.mubr.f32.mxu0 0.0
    %1317 = vmatmul.mubr.f32.gmra.mrb[0].mxu0 %v1009
    %v1318 = vpop.f32.mrb[0].mxu0
    %v1319 = vadd.f32 0.0, %v1318
    %v1320 = vpop.f32.mrb[0].mxu0
    %1321 = vdwg.mxu0
    %1322 = vmatprep.subr.mxu0 0.0
    %1323 = vmatpush1.msra.mxu0 %v1245
    %1324 = vmatprep.subr.mxu0 0.0
    %1325 = vmatpush1.msra.mxu0 %v1246
    %1326 = vmatprep.subr.mxu0 0.0
    %1327 = vmatpush1.msra.mxu0 0.0
    %1328 = vmatprep.subr.mxu0 0.0
    %1329 = vmatpush1.msra.mxu0 0.0
    %1330 = vmatprep.subr.mxu0 0.0
    %1331 = vmatpush1.msra.mxu0 0.0
    %1332 = vmatprep.subr.mxu0 0.0
    %1333 = vmatpush1.msra.mxu0 0.0
    %1334 = vmatprep.subr.mxu0 0.0
    %1335 = vmatpush1.msra.mxu0 0.0
    %1336 = vmatprep.subr.mxu0 0.0
    %1337 = vmatpush1.msra.mxu0 0.0
    %1338 = vmatprep.subr.mxu0 0.0
    %1339 = vmatpush1.msra.mxu0 0.0
    %1340 = vmatprep.subr.mxu0 0.0
    %1341 = vmatpush1.msra.mxu0 0.0
    %1342 = vmatprep.subr.mxu0 0.0
    %1343 = vmatpush1.msra.mxu0 0.0
    %1344 = vmatprep.subr.mxu0 0.0
    %1345 = vmatpush1.msra.mxu0 0.0
    %1346 = vmatprep.subr.mxu0 0.0
    %1347 = vmatpush1.msra.mxu0 0.0
    %1348 = vmatprep.subr.mxu0 0.0
    %1349 = vmatpush1.msra.mxu0 0.0
    %1350 = vmatprep.subr.mxu0 0.0
    %1351 = vmatpush1.msra.mxu0 0.0
    %1352 = vmatprep.subr.mxu0 0.0
    %1353 = vmatpush1.msra.mxu0 0.0
    %1354 = vmatprep.subr.mxu0 0.0
    %1355 = vmatpush1.msra.mxu0 0.0
    %1356 = vmatprep.subr.mxu0 0.0
    %1357 = vmatpush1.msra.mxu0 0.0
    %1358 = vmatprep.subr.mxu0 0.0
    %1359 = vmatpush1.msra.mxu0 0.0
    %1360 = vmatprep.subr.mxu0 0.0
    %1361 = vmatpush1.msra.mxu0 0.0
    %1362 = vmatprep.subr.mxu0 0.0
    %1363 = vmatpush1.msra.mxu0 0.0
    %1364 = vmatprep.subr.mxu0 0.0
    %1365 = vmatpush1.msra.mxu0 0.0
    %1366 = vmatprep.subr.mxu0 0.0
    %1367 = vmatpush1.msra.mxu0 0.0
    %1368 = vmatprep.subr.mxu0 0.0
    %1369 = vmatpush1.msra.mxu0 0.0
    %1370 = vmatprep.subr.mxu0 0.0
    %1371 = vmatpush1.msra.mxu0 0.0
    %1372 = vmatprep.subr.mxu0 0.0
    %1373 = vmatpush1.msra.mxu0 0.0
    %1374 = vmatprep.subr.mxu0 0.0
    %1375 = vmatpush1.msra.mxu0 0.0
    %1376 = vmatprep.subr.mxu0 0.0
    %1377 = vmatpush1.msra.mxu0 0.0
    %1378 = vmatprep.subr.mxu0 0.0
    %1379 = vmatpush1.msra.mxu0 0.0
    %1380 = vmatprep.subr.mxu0 0.0
    %1381 = vmatpush1.msra.mxu0 0.0
    %1382 = vmatprep.subr.mxu0 0.0
    %1383 = vmatpush1.msra.mxu0 0.0
    %1384 = vmatprep.subr.mxu0 0.0
    %1385 = vmatpush1.msra.mxu0 0.0
    %1386 = vmatprep.mubr.f32.mxu0 0.0
    %1387 = vmatmul.mubr.f32.gmra.mrb[0].mxu0 %v1083
    %v1388 = vpop.f32.mrb[0].mxu0
    %v1389 = vadd.f32 %v1319, %v1388
    %v1390 = vpop.f32.mrb[0].mxu0
    %1391 = vdwg.mxu0
    %s1392 = scalar_lea.vmem [#allocation17], 1
    %v1393 = vld [vmem:[%s1392] sm:$0x1]
    %v1395 = vlaneseq
    %v1396 = vshrl.u32 %v1395, 7
    %v1397 = vsub.s32 0, %v1396
    %v1398 = vrot.slane %v1393, %v1397
    %v1400 = vadd.f32 %v1389, %v1398
    %s1401 = scalar_lea.vmem [#allocation18], 32
    %v1402 = vld [vmem:[%s1401] sm:$0xff]
    %v1403 = vld [vmem:[%s1401 + $0x8] sm:$0xff]
    %v1404 = vld [vmem:[%s1401 + $0x10] sm:$0xff]
    %v1405 = vld [vmem:[%s1401 + $0x18] sm:$0xff]
    %s1406 = scalar_lea.vmem [#allocation20], 1
    %v1407 = vld [vmem:[%s1406] sm:$0x1]
    %v1409 = vlaneseq
    %v1410 = vshrl.u32 %v1409, 7
    %v1411 = vsub.s32 0, %v1410
    %v1412 = vrot.slane %v1407, %v1411
    %1414 = vmatprep.subr.mxu0 0.0
    %1415 = vmatpush1.msra.mxu0 %v1402
    %1416 = vmatprep.subr.mxu0 0.0
    %1417 = vmatpush1.msra.mxu0 %v1403
    %1418 = vmatprep.subr.mxu0 0.0
    %1419 = vmatpush1.msra.mxu0 %v1404
    %1420 = vmatprep.subr.mxu0 0.0
    %1421 = vmatpush1.msra.mxu0 %v1405
    %1422 = vmatprep.subr.mxu0 0.0
    %1423 = vmatpush1.msra.mxu0 0.0
    %1424 = vmatprep.subr.mxu0 0.0
    %1425 = vmatpush1.msra.mxu0 0.0
    %1426 = vmatprep.subr.mxu0 0.0
    %1427 = vmatpush1.msra.mxu0 0.0
    %1428 = vmatprep.subr.mxu0 0.0
    %1429 = vmatpush1.msra.mxu0 0.0
    %1430 = vmatprep.subr.mxu0 0.0
    %1431 = vmatpush1.msra.mxu0 0.0
    %1432 = vmatprep.subr.mxu0 0.0
    %1433 = vmatpush1.msra.mxu0 0.0
    %1434 = vmatprep.subr.mxu0 0.0
    %1435 = vmatpush1.msra.mxu0 0.0
    %1436 = vmatprep.subr.mxu0 0.0
    %1437 = vmatpush1.msra.mxu0 0.0
    %1438 = vmatprep.subr.mxu0 0.0
    %1439 = vmatpush1.msra.mxu0 0.0
    %1440 = vmatprep.subr.mxu0 0.0
    %1441 = vmatpush1.msra.mxu0 0.0
    %1442 = vmatprep.subr.mxu0 0.0
    %1443 = vmatpush1.msra.mxu0 0.0
    %1444 = vmatprep.subr.mxu0 0.0
    %1445 = vmatpush1.msra.mxu0 0.0
    %1446 = vmatprep.subr.mxu0 0.0
    %1447 = vmatpush1.msra.mxu0 0.0
    %1448 = vmatprep.subr.mxu0 0.0
    %1449 = vmatpush1.msra.mxu0 0.0
    %1450 = vmatprep.subr.mxu0 0.0
    %1451 = vmatpush1.msra.mxu0 0.0
    %1452 = vmatprep.subr.mxu0 0.0
    %1453 = vmatpush1.msra.mxu0 0.0
    %1454 = vmatprep.subr.mxu0 0.0
    %1455 = vmatpush1.msra.mxu0 0.0
    %1456 = vmatprep.subr.mxu0 0.0
    %1457 = vmatpush1.msra.mxu0 0.0
    %1458 = vmatprep.subr.mxu0 0.0
    %1459 = vmatpush1.msra.mxu0 0.0
    %1460 = vmatprep.subr.mxu0 0.0
    %1461 = vmatpush1.msra.mxu0 0.0
    %1462 = vmatprep.subr.mxu0 0.0
    %1463 = vmatpush1.msra.mxu0 0.0
    %1464 = vmatprep.subr.mxu0 0.0
    %1465 = vmatpush1.msra.mxu0 0.0
    %1466 = vmatprep.subr.mxu0 0.0
    %1467 = vmatpush1.msra.mxu0 0.0
    %1468 = vmatprep.subr.mxu0 0.0
    %1469 = vmatpush1.msra.mxu0 0.0
    %1470 = vmatprep.subr.mxu0 0.0
    %1471 = vmatpush1.msra.mxu0 0.0
    %1472 = vmatprep.subr.mxu0 0.0
    %1473 = vmatpush1.msra.mxu0 0.0
    %1474 = vmatprep.subr.mxu0 0.0
    %1475 = vmatpush1.msra.mxu0 0.0
    %1476 = vmatprep.subr.mxu0 0.0
    %1477 = vmatpush1.msra.mxu0 0.0
    %1478 = vmatprep.mubr.f32.mxu0 0.0
    %1479 = vmatmul.mubr.f32.gmra.mrb[0].mxu0 %v386
    %v1480 = vpop.f32.mrb[0].mxu0
    %v1481 = vadd.f32 %v1412, %v1480
    %v1482 = vpop.f32.mrb[0].mxu0
    %1483 = vdwg.mxu0
    %s1484 = scalar_lea.vmem [#allocation14], 32
    %v1485 = vld [vmem:[%s1484] sm:$0xff]
    %v1486 = vld [vmem:[%s1484 + $0x8] sm:$0xff]
    %s1487 = scalar_lea.vmem [#allocation15], 64
    %v1488 = vld [vmem:[%s1487] sm:$0xff]
    %v1489 = vld [vmem:[%s1487 + $0x8] sm:$0xff]
    %v1490 = vld [vmem:[%s1487 + $0x10] sm:$0xff]
    %v1491 = vld [vmem:[%s1487 + $0x18] sm:$0xff]
    %1492 = vmatprep.subr.mxu0 0.0
    %1493 = vmatpush1.msra.mxu0 %v1488
    %1494 = vmatprep.subr.mxu0 0.0
    %1495 = vmatpush1.msra.mxu0 %v1489
    %1496 = vmatprep.subr.mxu0 0.0
    %1497 = vmatpush1.msra.mxu0 %v1490
    %1498 = vmatprep.subr.mxu0 0.0
    %1499 = vmatpush1.msra.mxu0 %v1491
    %1500 = vmatprep.subr.mxu0 0.0
    %1501 = vmatpush1.msra.mxu0 0.0
    %1502 = vmatprep.subr.mxu0 0.0
    %1503 = vmatpush1.msra.mxu0 0.0
    %1504 = vmatprep.subr.mxu0 0.0
    %1505 = vmatpush1.msra.mxu0 0.0
    %1506 = vmatprep.subr.mxu0 0.0
    %1507 = vmatpush1.msra.mxu0 0.0
    %1508 = vmatprep.subr.mxu0 0.0
    %1509 = vmatpush1.msra.mxu0 0.0
    %1510 = vmatprep.subr.mxu0 0.0
    %1511 = vmatpush1.msra.mxu0 0.0
    %1512 = vmatprep.subr.mxu0 0.0
    %1513 = vmatpush1.msra.mxu0 0.0
    %1514 = vmatprep.subr.mxu0 0.0
    %1515 = vmatpush1.msra.mxu0 0.0
    %1516 = vmatprep.subr.mxu0 0.0
    %1517 = vmatpush1.msra.mxu0 0.0
    %1518 = vmatprep.subr.mxu0 0.0
    %1519 = vmatpush1.msra.mxu0 0.0
    %1520 = vmatprep.subr.mxu0 0.0
    %1521 = vmatpush1.msra.mxu0 0.0
    %1522 = vmatprep.subr.mxu0 0.0
    %1523 = vmatpush1.msra.mxu0 0.0
    %1524 = vmatprep.subr.mxu0 0.0
    %1525 = vmatpush1.msra.mxu0 0.0
    %1526 = vmatprep.subr.mxu0 0.0
    %1527 = vmatpush1.msra.mxu0 0.0
    %1528 = vmatprep.subr.mxu0 0.0
    %1529 = vmatpush1.msra.mxu0 0.0
    %1530 = vmatprep.subr.mxu0 0.0
    %1531 = vmatpush1.msra.mxu0 0.0
    %1532 = vmatprep.subr.mxu0 0.0
    %1533 = vmatpush1.msra.mxu0 0.0
    %1534 = vmatprep.subr.mxu0 0.0
    %1535 = vmatpush1.msra.mxu0 0.0
    %1536 = vmatprep.subr.mxu0 0.0
    %1537 = vmatpush1.msra.mxu0 0.0
    %1538 = vmatprep.subr.mxu0 0.0
    %1539 = vmatpush1.msra.mxu0 0.0
    %1540 = vmatprep.subr.mxu0 0.0
    %1541 = vmatpush1.msra.mxu0 0.0
    %1542 = vmatprep.subr.mxu0 0.0
    %1543 = vmatpush1.msra.mxu0 0.0
    %1544 = vmatprep.subr.mxu0 0.0
    %1545 = vmatpush1.msra.mxu0 0.0
    %1546 = vmatprep.subr.mxu0 0.0
    %1547 = vmatpush1.msra.mxu0 0.0
    %1548 = vmatprep.subr.mxu0 0.0
    %1549 = vmatpush1.msra.mxu0 0.0
    %1550 = vmatprep.subr.mxu0 0.0
    %1551 = vmatpush1.msra.mxu0 0.0
    %1552 = vmatprep.subr.mxu0 0.0
    %1553 = vmatpush1.msra.mxu0 0.0
    %1554 = vmatprep.subr.mxu0 0.0
    %1555 = vmatpush1.msra.mxu0 0.0
    %1556 = vmatprep.mubr.f32.mxu0 0.0
    %1557 = vmatmul.mubr.f32.gmra.mrb[0].mxu0 %v1009
    %v1558 = vpop.f32.mrb[0].mxu0
    %v1559 = vadd.f32 0.0, %v1558
    %v1560 = vpop.f32.mrb[0].mxu0
    %1561 = vdwg.mxu0
    %1562 = vmatprep.subr.mxu0 0.0
    %1563 = vmatpush1.msra.mxu0 %v1485
    %1564 = vmatprep.subr.mxu0 0.0
    %1565 = vmatpush1.msra.mxu0 %v1486
    %1566 = vmatprep.subr.mxu0 0.0
    %1567 = vmatpush1.msra.mxu0 0.0
    %1568 = vmatprep.subr.mxu0 0.0
    %1569 = vmatpush1.msra.mxu0 0.0
    %1570 = vmatprep.subr.mxu0 0.0
    %1571 = vmatpush1.msra.mxu0 0.0
    %1572 = vmatprep.subr.mxu0 0.0
    %1573 = vmatpush1.msra.mxu0 0.0
    %1574 = vmatprep.subr.mxu0 0.0
    %1575 = vmatpush1.msra.mxu0 0.0
    %1576 = vmatprep.subr.mxu0 0.0
    %1577 = vmatpush1.msra.mxu0 0.0
    %1578 = vmatprep.subr.mxu0 0.0
    %1579 = vmatpush1.msra.mxu0 0.0
    %1580 = vmatprep.subr.mxu0 0.0
    %1581 = vmatpush1.msra.mxu0 0.0
    %1582 = vmatprep.subr.mxu0 0.0
    %1583 = vmatpush1.msra.mxu0 0.0
    %1584 = vmatprep.subr.mxu0 0.0
    %1585 = vmatpush1.msra.mxu0 0.0
    %1586 = vmatprep.subr.mxu0 0.0
    %1587 = vmatpush1.msra.mxu0 0.0
    %1588 = vmatprep.subr.mxu0 0.0
    %1589 = vmatpush1.msra.mxu0 0.0
    %1590 = vmatprep.subr.mxu0 0.0
    %1591 = vmatpush1.msra.mxu0 0.0
    %1592 = vmatprep.subr.mxu0 0.0
    %1593 = vmatpush1.msra.mxu0 0.0
    %1594 = vmatprep.subr.mxu0 0.0
    %1595 = vmatpush1.msra.mxu0 0.0
    %1596 = vmatprep.subr.mxu0 0.0
    %1597 = vmatpush1.msra.mxu0 0.0
    %1598 = vmatprep.subr.mxu0 0.0
    %1599 = vmatpush1.msra.mxu0 0.0
    %1600 = vmatprep.subr.mxu0 0.0
    %1601 = vmatpush1.msra.mxu0 0.0
    %1602 = vmatprep.subr.mxu0 0.0
    %1603 = vmatpush1.msra.mxu0 0.0
    %1604 = vmatprep.subr.mxu0 0.0
    %1605 = vmatpush1.msra.mxu0 0.0
    %1606 = vmatprep.subr.mxu0 0.0
    %1607 = vmatpush1.msra.mxu0 0.0
    %1608 = vmatprep.subr.mxu0 0.0
    %1609 = vmatpush1.msra.mxu0 0.0
    %1610 = vmatprep.subr.mxu0 0.0
    %1611 = vmatpush1.msra.mxu0 0.0
    %1612 = vmatprep.subr.mxu0 0.0
    %1613 = vmatpush1.msra.mxu0 0.0
    %1614 = vmatprep.subr.mxu0 0.0
    %1615 = vmatpush1.msra.mxu0 0.0
    %1616 = vmatprep.subr.mxu0 0.0
    %1617 = vmatpush1.msra.mxu0 0.0
    %1618 = vmatprep.subr.mxu0 0.0
    %1619 = vmatpush1.msra.mxu0 0.0
    %1620 = vmatprep.subr.mxu0 0.0
    %1621 = vmatpush1.msra.mxu0 0.0
    %1622 = vmatprep.subr.mxu0 0.0
    %1623 = vmatpush1.msra.mxu0 0.0
    %1624 = vmatprep.subr.mxu0 0.0
    %1625 = vmatpush1.msra.mxu0 0.0
    %1626 = vmatprep.mubr.f32.mxu0 0.0
    %1627 = vmatmul.mubr.f32.gmra.mrb[0].mxu0 %v1083
    %v1628 = vpop.f32.mrb[0].mxu0
    %v1629 = vadd.f32 %v1559, %v1628
    %v1630 = vpop.f32.mrb[0].mxu0
    %1631 = vdwg.mxu0
    %s1632 = scalar_lea.vmem [#allocation17], 2
    %v1633 = vld [vmem:[%s1632] sm:$0x1]
    %v1635 = vlaneseq
    %v1636 = vshrl.u32 %v1635, 7
    %v1637 = vsub.s32 0, %v1636
    %v1638 = vrot.slane %v1633, %v1637
    %v1640 = vadd.f32 %v1629, %v1638
    %s1641 = scalar_lea.vmem [#allocation18], 64
    %v1642 = vld [vmem:[%s1641] sm:$0xff]
    %v1643 = vld [vmem:[%s1641 + $0x8] sm:$0xff]
    %v1644 = vld [vmem:[%s1641 + $0x10] sm:$0xff]
    %v1645 = vld [vmem:[%s1641 + $0x18] sm:$0xff]
    %s1646 = scalar_lea.vmem [#allocation20], 2
    %v1647 = vld [vmem:[%s1646] sm:$0x1]
    %v1649 = vlaneseq
    %v1650 = vshrl.u32 %v1649, 7
    %v1651 = vsub.s32 0, %v1650
    %v1652 = vrot.slane %v1647, %v1651
    %1654 = vmatprep.subr.mxu0 0.0
    %1655 = vmatpush1.msra.mxu0 %v1642
    %1656 = vmatprep.subr.mxu0 0.0
    %1657 = vmatpush1.msra.mxu0 %v1643
    %1658 = vmatprep.subr.mxu0 0.0
    %1659 = vmatpush1.msra.mxu0 %v1644
    %1660 = vmatprep.subr.mxu0 0.0
    %1661 = vmatpush1.msra.mxu0 %v1645
    %1662 = vmatprep.subr.mxu0 0.0
    %1663 = vmatpush1.msra.mxu0 0.0
    %1664 = vmatprep.subr.mxu0 0.0
    %1665 = vmatpush1.msra.mxu0 0.0
    %1666 = vmatprep.subr.mxu0 0.0
    %1667 = vmatpush1.msra.mxu0 0.0
    %1668 = vmatprep.subr.mxu0 0.0
    %1669 = vmatpush1.msra.mxu0 0.0
    %1670 = vmatprep.subr.mxu0 0.0
    %1671 = vmatpush1.msra.mxu0 0.0
    %1672 = vmatprep.subr.mxu0 0.0
    %1673 = vmatpush1.msra.mxu0 0.0
    %1674 = vmatprep.subr.mxu0 0.0
    %1675 = vmatpush1.msra.mxu0 0.0
    %1676 = vmatprep.subr.mxu0 0.0
    %1677 = vmatpush1.msra.mxu0 0.0
    %1678 = vmatprep.subr.mxu0 0.0
    %1679 = vmatpush1.msra.mxu0 0.0
    %1680 = vmatprep.subr.mxu0 0.0
    %1681 = vmatpush1.msra.mxu0 0.0
    %1682 = vmatprep.subr.mxu0 0.0
    %1683 = vmatpush1.msra.mxu0 0.0
    %1684 = vmatprep.subr.mxu0 0.0
    %1685 = vmatpush1.msra.mxu0 0.0
    %1686 = vmatprep.subr.mxu0 0.0
    %1687 = vmatpush1.msra.mxu0 0.0
    %1688 = vmatprep.subr.mxu0 0.0
    %1689 = vmatpush1.msra.mxu0 0.0
    %1690 = vmatprep.subr.mxu0 0.0
    %1691 = vmatpush1.msra.mxu0 0.0
    %1692 = vmatprep.subr.mxu0 0.0
    %1693 = vmatpush1.msra.mxu0 0.0
    %1694 = vmatprep.subr.mxu0 0.0
    %1695 = vmatpush1.msra.mxu0 0.0
    %1696 = vmatprep.subr.mxu0 0.0
    %1697 = vmatpush1.msra.mxu0 0.0
    %1698 = vmatprep.subr.mxu0 0.0
    %1699 = vmatpush1.msra.mxu0 0.0
    %1700 = vmatprep.subr.mxu0 0.0
    %1701 = vmatpush1.msra.mxu0 0.0
    %1702 = vmatprep.subr.mxu0 0.0
    %1703 = vmatpush1.msra.mxu0 0.0
    %1704 = vmatprep.subr.mxu0 0.0
    %1705 = vmatpush1.msra.mxu0 0.0
    %1706 = vmatprep.subr.mxu0 0.0
    %1707 = vmatpush1.msra.mxu0 0.0
    %1708 = vmatprep.subr.mxu0 0.0
    %1709 = vmatpush1.msra.mxu0 0.0
    %1710 = vmatprep.subr.mxu0 0.0
    %1711 = vmatpush1.msra.mxu0 0.0
    %1712 = vmatprep.subr.mxu0 0.0
    %1713 = vmatpush1.msra.mxu0 0.0
    %1714 = vmatprep.subr.mxu0 0.0
    %1715 = vmatpush1.msra.mxu0 0.0
    %1716 = vmatprep.subr.mxu0 0.0
    %1717 = vmatpush1.msra.mxu0 0.0
    %1718 = vmatprep.mubr.f32.mxu0 0.0
    %1719 = vmatmul.mubr.f32.gmra.mrb[0].mxu0 %v386
    %v1720 = vpop.f32.mrb[0].mxu0
    %v1721 = vadd.f32 %v1652, %v1720
    %v1722 = vpop.f32.mrb[0].mxu0
    %1723 = vdwg.mxu0
    %v1724 = vadd.f32 %v1162, %v1241
    %v1725 = vxor.u32 %v1724, 2147483648
    %v1726 = vmul.f32 %v1725, 1.442695
    %v1727 = vpow.pop %v1726
    %v1728 = vadd.f32 %v1727, 1.0
    %v1729 = vrcp.pop %v1728
    %v1730 = vmul.f32 1.0, %v1729
    %v1731 = vadd.f32 %v1400, %v1481
    %v1732 = vxor.u32 %v1731, 2147483648
    %v1733 = vmul.f32 %v1732, 1.442695
    %v1734 = vpow.pop %v1733
    %v1735 = vadd.f32 %v1734, 1.0
    %v1736 = vrcp.pop %v1735
    %v1737 = vmul.f32 1.0, %v1736
    %v1738 = vmul.f32 %v1730, %v1721
    %v1739 = vadd.f32 %v1640, %v1738
    %v1740 = vtanh.pop %v1739
    %v1741 = vsub.f32 1.0, %v1737
    %v1742 = vmul.f32 %v1741, %v1740
    %v1743 = vmul.f32 %v1737, %v371
    %v1744 = vadd.f32 %v1742, %v1743
    %v1745 = vld [vmem:[%s12] sm:$0xff]
    %v1746 = vld [vmem:[%s12 + $0x8] sm:$0xff]
    %v1747 = vld [vmem:[%s12 + $0x10] sm:$0xff]
    %v1748 = vld [vmem:[%s12 + $0x18] sm:$0xff]
    %v1749 = vld [vmem:[#allocation21] sm:$0xff]
    %v1750 = vld [vmem:[#allocation21 + $0x8] sm:$0xff]
    %v1751 = vld [vmem:[#allocation21 + $0x10] sm:$0xff]
    %v1752 = vld [vmem:[#allocation21 + $0x18] sm:$0xff]
    %1753 = vmatprep.subr.mxu0 0.0
    %1754 = vmatpush1.msra.mxu0 %v1749
    %1755 = vmatprep.subr.mxu0 0.0
    %1756 = vmatpush1.msra.mxu0 %v1750
    %1757 = vmatprep.subr.mxu0 0.0
    %1758 = vmatpush1.msra.mxu0 %v1751
    %1759 = vmatprep.subr.mxu0 0.0
    %1760 = vmatpush1.msra.mxu0 %v1752
    %1761 = vmatprep.subr.mxu0 0.0
    %1762 = vmatpush1.msra.mxu0 0.0
    %1763 = vmatprep.subr.mxu0 0.0
    %1764 = vmatpush1.msra.mxu0 0.0
    %1765 = vmatprep.subr.mxu0 0.0
    %1766 = vmatpush1.msra.mxu0 0.0
    %1767 = vmatprep.subr.mxu0 0.0
    %1768 = vmatpush1.msra.mxu0 0.0
    %1769 = vmatprep.subr.mxu0 0.0
    %1770 = vmatpush1.msra.mxu0 0.0
    %1771 = vmatprep.subr.mxu0 0.0
    %1772 = vmatpush1.msra.mxu0 0.0
    %1773 = vmatprep.subr.mxu0 0.0
    %1774 = vmatpush1.msra.mxu0 0.0
    %1775 = vmatprep.subr.mxu0 0.0
    %1776 = vmatpush1.msra.mxu0 0.0
    %1777 = vmatprep.subr.mxu0 0.0
    %1778 = vmatpush1.msra.mxu0 0.0
    %1779 = vmatprep.subr.mxu0 0.0
    %1780 = vmatpush1.msra.mxu0 0.0
    %1781 = vmatprep.subr.mxu0 0.0
    %1782 = vmatpush1.msra.mxu0 0.0
    %1783 = vmatprep.subr.mxu0 0.0
    %1784 = vmatpush1.msra.mxu0 0.0
    %1785 = vmatprep.subr.mxu0 0.0
    %1786 = vmatpush1.msra.mxu0 0.0
    %1787 = vmatprep.subr.mxu0 0.0
    %1788 = vmatpush1.msra.mxu0 0.0
    %1789 = vmatprep.subr.mxu0 0.0
    %1790 = vmatpush1.msra.mxu0 0.0
    %1791 = vmatprep.subr.mxu0 0.0
    %1792 = vmatpush1.msra.mxu0 0.0
    %1793 = vmatprep.subr.mxu0 0.0
    %1794 = vmatpush1.msra.mxu0 0.0
    %1795 = vmatprep.subr.mxu0 0.0
    %1796 = vmatpush1.msra.mxu0 0.0
    %1797 = vmatprep.subr.mxu0 0.0
    %1798 = vmatpush1.msra.mxu0 0.0
    %1799 = vmatprep.subr.mxu0 0.0
    %1800 = vmatpush1.msra.mxu0 0.0
    %1801 = vmatprep.subr.mxu0 0.0
    %1802 = vmatpush1.msra.mxu0 0.0
    %1803 = vmatprep.subr.mxu0 0.0
    %1804 = vmatpush1.msra.mxu0 0.0
    %1805 = vmatprep.subr.mxu0 0.0
    %1806 = vmatpush1.msra.mxu0 0.0
    %1807 = vmatprep.subr.mxu0 0.0
    %1808 = vmatpush1.msra.mxu0 0.0
    %1809 = vmatprep.subr.mxu0 0.0
    %1810 = vmatpush1.msra.mxu0 0.0
    %1811 = vmatprep.subr.mxu0 0.0
    %1812 = vmatpush1.msra.mxu0 0.0
    %1813 = vmatprep.subr.mxu0 0.0
    %1814 = vmatpush1.msra.mxu0 0.0
    %1815 = vmatprep.subr.mxu0 0.0
    %1816 = vmatpush1.msra.mxu0 0.0
    %1817 = vmatprep.mubr.f32.mxu0 0.0
    %1818 = vmatmul.mubr.f32.gmra.mrb[0].mxu0 %v1009
    %v1819 = vpop.f32.mrb[0].mxu0
    %v1820 = vadd.f32 0.0, %v1819
    %v1821 = vpop.f32.mrb[0].mxu0
    %1822 = vdwg.mxu0
    %v1824 = vsel %vm384, %v1744, 0
    %1826 = vmatprep.subr.mxu0 0.0
    %1827 = vmatpush1.msra.mxu0 %v1745
    %1828 = vmatprep.subr.mxu0 0.0
    %1829 = vmatpush1.msra.mxu0 %v1746
    %1830 = vmatprep.subr.mxu0 0.0
    %1831 = vmatpush1.msra.mxu0 %v1747
    %1832 = vmatprep.subr.mxu0 0.0
    %1833 = vmatpush1.msra.mxu0 %v1748
    %1834 = vmatprep.subr.mxu0 0.0
    %1835 = vmatpush1.msra.mxu0 0.0
    %1836 = vmatprep.subr.mxu0 0.0
    %1837 = vmatpush1.msra.mxu0 0.0
    %1838 = vmatprep.subr.mxu0 0.0
    %1839 = vmatpush1.msra.mxu0 0.0
    %1840 = vmatprep.subr.mxu0 0.0
    %1841 = vmatpush1.msra.mxu0 0.0
    %1842 = vmatprep.subr.mxu0 0.0
    %1843 = vmatpush1.msra.mxu0 0.0
    %1844 = vmatprep.subr.mxu0 0.0
    %1845 = vmatpush1.msra.mxu0 0.0
    %1846 = vmatprep.subr.mxu0 0.0
    %1847 = vmatpush1.msra.mxu0 0.0
    %1848 = vmatprep.subr.mxu0 0.0
    %1849 = vmatpush1.msra.mxu0 0.0
    %1850 = vmatprep.subr.mxu0 0.0
    %1851 = vmatpush1.msra.mxu0 0.0
    %1852 = vmatprep.subr.mxu0 0.0
    %1853 = vmatpush1.msra.mxu0 0.0
    %1854 = vmatprep.subr.mxu0 0.0
    %1855 = vmatpush1.msra.mxu0 0.0
    %1856 = vmatprep.subr.mxu0 0.0
    %1857 = vmatpush1.msra.mxu0 0.0
    %1858 = vmatprep.subr.mxu0 0.0
    %1859 = vmatpush1.msra.mxu0 0.0
    %1860 = vmatprep.subr.mxu0 0.0
    %1861 = vmatpush1.msra.mxu0 0.0
    %1862 = vmatprep.subr.mxu0 0.0
    %1863 = vmatpush1.msra.mxu0 0.0
    %1864 = vmatprep.subr.mxu0 0.0
    %1865 = vmatpush1.msra.mxu0 0.0
    %1866 = vmatprep.subr.mxu0 0.0
    %1867 = vmatpush1.msra.mxu0 0.0
    %1868 = vmatprep.subr.mxu0 0.0
    %1869 = vmatpush1.msra.mxu0 0.0
    %1870 = vmatprep.subr.mxu0 0.0
    %1871 = vmatpush1.msra.mxu0 0.0
    %1872 = vmatprep.subr.mxu0 0.0
    %1873 = vmatpush1.msra.mxu0 0.0
    %1874 = vmatprep.subr.mxu0 0.0
    %1875 = vmatpush1.msra.mxu0 0.0
    %1876 = vmatprep.subr.mxu0 0.0
    %1877 = vmatpush1.msra.mxu0 0.0
    %1878 = vmatprep.subr.mxu0 0.0
    %1879 = vmatpush1.msra.mxu0 0.0
    %1880 = vmatprep.subr.mxu0 0.0
    %1881 = vmatpush1.msra.mxu0 0.0
    %1882 = vmatprep.subr.mxu0 0.0
    %1883 = vmatpush1.msra.mxu0 0.0
    %1884 = vmatprep.subr.mxu0 0.0
    %1885 = vmatpush1.msra.mxu0 0.0
    %1886 = vmatprep.subr.mxu0 0.0
    %1887 = vmatpush1.msra.mxu0 0.0
    %1888 = vmatprep.subr.mxu0 0.0
    %1889 = vmatpush1.msra.mxu0 0.0
    %1890 = vmatprep.mubr.f32.mxu0 0.0
    %1891 = vmatmul.mubr.f32.gmra.mrb[0].mxu0 %v1824
    %v1892 = vpop.f32.mrb[0].mxu0
    %v1893 = vadd.f32 %v1820, %v1892
    %v1894 = vpop.f32.mrb[0].mxu0
    %1895 = vdwg.mxu0
    %v1896 = vld [vmem:[%s14] sm:$0xff]
    %v1897 = vld [vmem:[%s14 + $0x8] sm:$0xff]
    %1898 = vmatprep.subr.mxu0 0.0
    %1899 = vmatpush1.msra.mxu0 %v1896
    %1900 = vmatprep.subr.mxu0 0.0
    %1901 = vmatpush1.msra.mxu0 %v1897
    %1902 = vmatprep.subr.mxu0 0.0
    %1903 = vmatpush1.msra.mxu0 0.0
    %1904 = vmatprep.subr.mxu0 0.0
    %1905 = vmatpush1.msra.mxu0 0.0
    %1906 = vmatprep.subr.mxu0 0.0
    %1907 = vmatpush1.msra.mxu0 0.0
    %1908 = vmatprep.subr.mxu0 0.0
    %1909 = vmatpush1.msra.mxu0 0.0
    %1910 = vmatprep.subr.mxu0 0.0
    %1911 = vmatpush1.msra.mxu0 0.0
    %1912 = vmatprep.subr.mxu0 0.0
    %1913 = vmatpush1.msra.mxu0 0.0
    %1914 = vmatprep.subr.mxu0 0.0
    %1915 = vmatpush1.msra.mxu0 0.0
    %1916 = vmatprep.subr.mxu0 0.0
    %1917 = vmatpush1.msra.mxu0 0.0
    %1918 = vmatprep.subr.mxu0 0.0
    %1919 = vmatpush1.msra.mxu0 0.0
    %1920 = vmatprep.subr.mxu0 0.0
    %1921 = vmatpush1.msra.mxu0 0.0
    %1922 = vmatprep.subr.mxu0 0.0
    %1923 = vmatpush1.msra.mxu0 0.0
    %1924 = vmatprep.subr.mxu0 0.0
    %1925 = vmatpush1.msra.mxu0 0.0
    %1926 = vmatprep.subr.mxu0 0.0
    %1927 = vmatpush1.msra.mxu0 0.0
    %1928 = vmatprep.subr.mxu0 0.0
    %1929 = vmatpush1.msra.mxu0 0.0
    %1930 = vmatprep.subr.mxu0 0.0
    %1931 = vmatpush1.msra.mxu0 0.0
    %1932 = vmatprep.subr.mxu0 0.0
    %1933 = vmatpush1.msra.mxu0 0.0
    %1934 = vmatprep.subr.mxu0 0.0
    %1935 = vmatpush1.msra.mxu0 0.0
    %1936 = vmatprep.subr.mxu0 0.0
    %1937 = vmatpush1.msra.mxu0 0.0
    %1938 = vmatprep.subr.mxu0 0.0
    %1939 = vmatpush1.msra.mxu0 0.0
    %1940 = vmatprep.subr.mxu0 0.0
    %1941 = vmatpush1.msra.mxu0 0.0
    %1942 = vmatprep.subr.mxu0 0.0
    %1943 = vmatpush1.msra.mxu0 0.0
    %1944 = vmatprep.subr.mxu0 0.0
    %1945 = vmatpush1.msra.mxu0 0.0
    %1946 = vmatprep.subr.mxu0 0.0
    %1947 = vmatpush1.msra.mxu0 0.0
    %1948 = vmatprep.subr.mxu0 0.0
    %1949 = vmatpush1.msra.mxu0 0.0
    %1950 = vmatprep.subr.mxu0 0.0
    %1951 = vmatpush1.msra.mxu0 0.0
    %1952 = vmatprep.subr.mxu0 0.0
    %1953 = vmatpush1.msra.mxu0 0.0
    %1954 = vmatprep.subr.mxu0 0.0
    %1955 = vmatpush1.msra.mxu0 0.0
    %1956 = vmatprep.subr.mxu0 0.0
    %1957 = vmatpush1.msra.mxu0 0.0
    %1958 = vmatprep.subr.mxu0 0.0
    %1959 = vmatpush1.msra.mxu0 0.0
    %1960 = vmatprep.subr.mxu0 0.0
    %1961 = vmatpush1.msra.mxu0 0.0
    %1962 = vmatprep.mubr.f32.mxu0 0.0
    %1963 = vmatmul.mubr.f32.gmra.mrb[0].mxu0 %v1083
    %v1964 = vpop.f32.mrb[0].mxu0
    %v1965 = vadd.f32 0.0, %v1964
    %v1966 = vpop.f32.mrb[0].mxu0
    %1967 = vdwg.mxu0
    %v1968 = vadd.f32 %v1893, %v1965
    %v1969 = vld [vmem:[%s15] sm:$0x1]
    %v1971 = vlaneseq
    %v1972 = vshrl.u32 %v1971, 7
    %v1973 = vsub.s32 0, %v1972
    %v1974 = vrot.slane %v1969, %v1973
    %v1976 = vadd.f32 %v1968, %v1974
    %1977 = vst [vmem:[#allocation23] sm:$0xff] %v1976
    %1978 = vst.msk [vmem:[#allocation24] sm:$0xff] %vm384, %v1744
    // Predicated region
    $region118: #{tpu_custom_call.1} parent=1 // pred_check
      _
    $region119: #{tpu_custom_call.1} parent=1 // pred_check_branch
      %1980 = sbr.rel (0) target = $region121
    $region120: #{tpu_custom_call.1} parent=1 // pred_region
      %s1982 = ssub.s32 128, 128
      %1983 = vsyncadd [#allocation5], %s1982
      %s1985 = sshll.u32 [#allocation23], 4
      %s1986 = int_to_ptr.vmem [resolvable:$true] %s1985
      %1988 = dma.vmem_to_hbm [thread:$0]  %s1986, 128, %s16, [#allocation5]
    $region121: #{tpu_custom_call.1} parent=1 // pred_fallthru
      _
    // Predicated region
    $region122: #{tpu_custom_call.1} parent=1 // pred_check
      _
    $region123: #{tpu_custom_call.1} parent=1 // pred_check_branch
      %1990 = sbr.rel (0) target = $region125
    $region124: #{tpu_custom_call.1} parent=1 // pred_region
      %s1992 = ssub.s32 128, 128
      %1993 = vsyncadd [#allocation25], %s1992
      %s1995 = sshll.u32 [#allocation24], 4
      %s1996 = int_to_ptr.vmem [resolvable:$true] %s1995
      %1998 = dma.vmem_to_hbm [thread:$0]  %s1996, 128, %s17, [#allocation25]
    $region125: #{tpu_custom_call.1} parent=1 // pred_fallthru
      _
    // Predicated region
    $region126: #{tpu_custom_call.1} parent=1 // pred_check
      _
    $region127: #{tpu_custom_call.1} parent=1 // pred_check_branch
      %2000 = sbr.rel (0) target = $region129
    $region128: #{tpu_custom_call.1} parent=1 // pred_region
      %2001 = dma.done [#allocation5], 128
    $region129: #{tpu_custom_call.1} parent=1 // pred_fallthru
      _
    // Predicated region
    $region130: #{tpu_custom_call.1} parent=1 // pred_check
      _
    $region131: #{tpu_custom_call.1} parent=1 // pred_check_branch
      %2003 = sbr.rel (0) target = $region133
    $region132: #{tpu_custom_call.1} parent=1 // pred_region
      %2004 = dma.done [#allocation25], 128
    $region133: #{tpu_custom_call.1} parent=1 // pred_fallthru
      _
    %2005 = vsyncpa [#allocation4], 1
    %2006 = vsyncpa [#allocation7], 1
    %2007 = vsyncpa [#allocation10], 1
    %2008 = vsyncpa [#allocation13], 1
    %2009 = vsyncpa [#allocation16], 1
    %2010 = vsyncpa [#allocation19], 1
    %2011 = vsyncpa [#allocation22], 1
    %2012 = vsyncpa [#allocation5], 1
    %2013 = vsyncpa [#allocation25], 1

</llo_original>
